<compile_context>
chip_gen: v6e
topology: v6e:2x2x1
jax: 0.10.0
libtpu: 0.0.40
codegen_flags: <defaults>
</compile_context>

<pallas_src>
import functools

import jax
import jax.numpy as jnp
from jax import lax
from jax.experimental import pallas as pl
from jax.experimental.pallas import tpu as pltpu

# conv-stack hyper-parameters fixed by the nn.Module definition
_K1, _S1 = 8, 4
_K2, _S2 = 4, 2
_K3, _S3 = 3, 1


def _conv_hw(h, w, k, s):
    return (h - k) // s + 1, (w - k) // s + 1


# ---------------------------------------------------------------------------
# The fused forward kernel (conv1 + conv2 + conv3 + fc1 + fc2)
# ---------------------------------------------------------------------------
def _fused_forward_kernel(p1_ref, fsa_ref,
                          w1_ref, b1_ref, w2_ref, b2_ref, w3_ref, b3_ref,
                          wf1c_ref, wf1f_ref, bf1_ref, wf2_ref, bf2_ref,
                          out_ref, *, batch, n_pos2):
    """Whole forward pass, fully VMEM/vreg resident.

    p1 rows are ordered (conv2 tap, conv2 output position, batch).  Every
    matmul operand is bf16; accumulation, bias adds and ReLUs are f32.
    """
    f32 = jnp.float32
    c1 = w1_ref.shape[1]                  # conv1 output channels (32)
    n_taps2 = w2_ref.shape[0] // c1       # conv2 taps (k2*k2 = 16)
    rpt = n_pos2 * batch                  # rows per conv2 tap block (9*B)

    # conv1: ONE (taps*pos*B, C*k1*k1) x (C*k1*k1, 32) matmul (+bias, ReLU).
    y1 = jnp.dot(p1_ref[...], w1_ref[...], preferred_element_type=f32)
    y1 = jnp.maximum(y1 + b1_ref[...], 0.0).astype(jnp.bfloat16)

    # conv2: 16 per-tap matmuls with (position, batch) in the M dimension;
    # y1 stays one 2-D array, each tap is a contiguous row slice.
    acc2 = b2_ref[...]                                            # (1, 64) f32
    for t in range(n_taps2):
        acc2 = acc2 + jnp.dot(y1[t * rpt:(t + 1) * rpt, :],
                              w2_ref[t * c1:(t + 1) * c1, :],
                              preferred_element_type=f32)
    y2 = jnp.maximum(acc2, 0.0).astype(jnp.bfloat16)              # (9*B, 64)

    # conv3 (oh3 = ow3 = 1): a single (B, 9*64) x (9*64, 64) matmul on the
    # lane-concatenation of the per-position blocks.  Column order (y, x, c)
    # matches w3's (dy, dx, cin) row order.
    flat2 = jnp.concatenate(
        [y2[p * batch:(p + 1) * batch, :] for p in range(n_pos2)], axis=1)
    y3 = jnp.dot(flat2, w3_ref[...], preferred_element_type=f32)
    y3 = jnp.maximum(y3 + b3_ref[...], 0.0).astype(jnp.bfloat16)  # (B, 64)

    # fc1: conv branch on the MXU; tiny fsa branch (K = fsa_dims) as VPU FMAs
    # (a K=2 MXU matmul would waste a whole padded push).
    h = jnp.dot(y3, wf1c_ref[...], preferred_element_type=f32)    # (B, 512) f32
    fsa = fsa_ref[...]                                            # (B, fsa_dims)
    for j in range(fsa.shape[1]):
        h = h + fsa[:, j:j + 1] * wf1f_ref[j:j + 1, :]
    h = jnp.maximum(h + bf1_ref[...], 0.0).astype(jnp.bfloat16)

    # fc2: columns zero-padded to 128 -> lane-dense output store.
    out_ref[...] = (jnp.dot(h, wf2_ref[...], preferred_element_type=f32)
                    + bf2_ref[...])


# ---------------------------------------------------------------------------
# JAX wrapper: patch extraction / tap re-ordering in XLA + one pallas_call
# ---------------------------------------------------------------------------
@functools.partial(jax.jit, static_argnames=("n_actions",))
def fsa_dqn_forward(prep, image, logic, *, n_actions):
    """image: (B, C, H, W) int, logic: (B, T, fsa_dims) int -> (B, n_actions) f32."""
    b, c, h, w = image.shape
    oh1, ow1 = _conv_hw(h, w, _K1, _S1)
    oh2, ow2 = _conv_hw(oh1, ow1, _K2, _S2)
    oh3, ow3 = _conv_hw(oh2, ow2, _K3, _S3)
    if (oh3, ow3) != (1, 1):
        # TODO(synk): geometries with oh3*ow3 > 1 (e.g. Atari 84x84) need an
        # extra in-kernel conv3 im2col stage; this fused kernel specializes to
        # the oh3 == ow3 == 1 family exercised by the test shapes.
        raise NotImplementedError("fused kernel requires oh3 == ow3 == 1")
    feat = c * _K1 * _K1

    fx = image.astype(jnp.float32)                       # /256 folded into w1
    # conv1 patches, feature order (c, kh, kw) == PyTorch weight reshape order.
    patches = lax.conv_general_dilated_patches(
        fx, filter_shape=(_K1, _K1), window_strides=(_S1, _S1), padding="VALID",
        dimension_numbers=("NCHW", "OIHW", "NHWC"))      # (B, oh1, ow1, feat)

    # Re-order (and duplicate) the patch rows so that inside the kernel every
    # conv2 tap (dy, dx) is one contiguous block of rows ordered (oy2, ox2, b):
    # no in-kernel gathers, reshapes or per-position Python lists are needed.
    taps = []
    for dy in range(_K2):
        for dx in range(_K2):
            taps.append(patches[:, dy:dy + _S2 * (oh2 - 1) + 1:_S2,
                                dx:dx + _S2 * (ow2 - 1) + 1:_S2, :])
    p1 = jnp.stack(taps, axis=0)                         # (16, B, oh2, ow2, feat)
    p1 = (p1.transpose(0, 2, 3, 1, 4)                    # (16, oh2, ow2, B, feat)
            .reshape(_K2 * _K2 * oh2 * ow2 * b, feat)
            .astype(jnp.bfloat16))

    fsa = logic[:, -1].astype(jnp.float32)               # x['logic'][:, -1].float()

    kernel = functools.partial(_fused_forward_kernel, batch=b, n_pos2=oh2 * ow2)
    vmem = pl.BlockSpec(memory_space=pltpu.MemorySpace.VMEM)
    out_pad = pl.pallas_call(
        kernel,
        out_shape=jax.ShapeDtypeStruct((b, prep["wf2"].shape[1]), jnp.float32),
        in_specs=[vmem] * 13,
        out_specs=vmem,
    )(p1, fsa,
      prep["w1"], prep["b1"], prep["w2"], prep["b2"], prep["w3"], prep["b3"],
      prep["wf1c"], prep["wf1f"], prep["bf1"], prep["wf2"], prep["bf2"])
    return out_pad[:, :n_actions]


# ---------------------------------------------------------------------------
# Parameters: PyTorch layout + one-time re-layout into kernel operands
# ---------------------------------------------------------------------------
def init_params(key, in_ch, conv_out_size, fsa_dims, n_actions):
    """PyTorch-layout parameters (same shapes as the nn.Module)."""
    ks = jax.random.split(key, 10)

    def w_init(k, shape, fan_in):
        return jax.random.normal(k, shape, jnp.float32) / jnp.sqrt(jnp.float32(fan_in))

    def b_init(k, shape):
        return jax.random.normal(k, shape, jnp.float32) * 0.01

    return {
        "c1w": w_init(ks[0], (32, in_ch, _K1, _K1), in_ch * _K1 * _K1),
        "c1b": b_init(ks[1], (32,)),
        "c2w": w_init(ks[2], (64, 32, _K2, _K2), 32 * _K2 * _K2),
        "c2b": b_init(ks[3], (64,)),
        "c3w": w_init(ks[4], (64, 64, _K3, _K3), 64 * _K3 * _K3),
        "c3b": b_init(ks[5], (64,)),
        "f1w": w_init(ks[6], (512, conv_out_size + fsa_dims), conv_out_size + fsa_dims),
        "f1b": b_init(ks[7], (512,)),
        "f2w": w_init(ks[8], (n_actions, 512), 512),
        "f2b": b_init(ks[9], (n_actions,)),
    }


def prepare_params(params, image_hw):
    """One-time reshape/permute/scale/cast of PyTorch params into kernel layout."""
    h, w = image_hw
    oh1, ow1 = _conv_hw(h, w, _K1, _S1)
    oh2, ow2 = _conv_hw(oh1, ow1, _K2, _S2)
    oh3, ow3 = _conv_hw(oh2, ow2, _K3, _S3)
    assert (oh3, ow3) == (1, 1), "fused kernel supports oh3 == ow3 == 1 geometries"

    c1w, c2w, c3w = params["c1w"], params["c2w"], params["c3w"]
    o1, o2, o3 = c1w.shape[0], c2w.shape[0], c3w.shape[0]
    conv_out_size = o3 * oh3 * ow3

    f1w = params["f1w"]
    hid = f1w.shape[0]
    # fc1's conv columns are in PyTorch NCHW flatten order (c, y, x); the
    # kernel produces (y, x, c) order (trivially just (c) when oh3=ow3=1).
    wf1c = (f1w[:, :conv_out_size]
            .reshape(hid, o3, oh3, ow3)
            .transpose(2, 3, 1, 0)
            .reshape(conv_out_size, hid))

    f2w, f2b = params["f2w"], params["f2b"]
    n_actions = f2w.shape[0]
    n_pad = ((n_actions + 127) // 128) * 128          # lane-dense output columns
    wf2 = jnp.zeros((hid, n_pad), jnp.float32).at[:, :n_actions].set(f2w.T)
    bf2 = jnp.zeros((1, n_pad), jnp.float32).at[:, :n_actions].set(f2b[None, :])

    bf16 = jnp.bfloat16
    return {
        # conv1 consumes (c, kh, kw)-ordered patches; /256 folded in; bf16 MXU operand.
        "w1": (c1w.reshape(o1, -1).T / 256.0).astype(bf16),
        "b1": params["c1b"].reshape(1, -1),
        # conv2/3 tap rows in (dy, dx, cin) order; bf16 MXU operands.
        "w2": c2w.transpose(2, 3, 1, 0).reshape(-1, o2).astype(bf16),
        "b2": params["c2b"].reshape(1, -1),
        "w3": c3w.transpose(2, 3, 1, 0).reshape(-1, o3).astype(bf16),
        "b3": params["c3b"].reshape(1, -1),
        "wf1c": wf1c.astype(bf16),
        "wf1f": f1w[:, conv_out_size:].T,             # f32: used on the VPU (FMA)
        "bf1": params["f1b"].reshape(1, -1),
        "wf2": wf2.astype(bf16),
        "bf2": bf2,
    }


# ---------------------------------------------------------------------------
# Pure-JAX reference (replicates the PyTorch forward) for validation
# ---------------------------------------------------------------------------
def reference_forward(params, image, logic):
    dn = ("NCHW", "OIHW", "NCHW")
    hp = lax.Precision.HIGHEST

    def conv(x, w, b, s):
        y = lax.conv_general_dilated(x, w, (s, s), "VALID",
                                     dimension_numbers=dn, precision=hp)
        return jnp.maximum(y + b[None, :, None, None], 0.0)

    fx = image.astype(jnp.float32) / 256.0
    h = conv(fx, params["c1w"], params["c1b"], _S1)
    h = conv(h, params["c2w"], params["c2b"], _S2)
    h = conv(h, params["c3w"], params["c3b"], _S3)
    conv_out = h.reshape(image.shape[0], -1)
    fsa = logic[:, -1].astype(jnp.float32)
    appended = jnp.concatenate([conv_out, fsa], axis=1)
    h = jnp.maximum(jnp.dot(appended, params["f1w"].T, precision=hp) + params["f1b"], 0.0)
    return jnp.dot(h, params["f2w"].T, precision=hp) + params["f2b"]


if __name__ == "__main__":
    # Small shapes consistent with the conv stack (k8/s4 -> k4/s2 -> k3/s1):
    # 36x36 (oh1=8) and 40x40 (oh1=9) both end at a 1x1x64 conv output.
    C, T, fsa_dims, n_actions = 4, 8, 2, 4
    key = jax.random.PRNGKey(0)
    k_params, k_a, k_b, k_c, k_d = jax.random.split(key, 5)

    conv_out_size = 64            # 64 * oh3 * ow3 with oh3 = ow3 = 1
    params = init_params(k_params, C, conv_out_size, fsa_dims, n_actions)
    prep = prepare_params(params, (36, 36))   # one-time weight re-layout (bf16 + padding)

    def check(k_img, k_logic, B, H, W):
        image = jax.random.randint(k_img, (B, C, H, W), 0, 256, dtype=jnp.int32)
        logic = jax.random.randint(k_logic, (B, T, fsa_dims), 0, 3, dtype=jnp.int32)
        out = jax.block_until_ready(
            fsa_dqn_forward(prep, image, logic, n_actions=n_actions))
        assert out.shape == (B, n_actions), out.shape
        assert out.dtype == jnp.float32, out.dtype
        ref = jax.block_until_ready(reference_forward(params, image, logic))
        max_err = float(jnp.max(jnp.abs(out - ref)))
        assert max_err < 5e-2, f"mismatch vs pure-JAX reference: max abs err = {max_err}"

    # Validate at two (B, H, W) geometries (per the review's correctness note).
    check(k_a, k_b, 2, 36, 36)
    check(k_c, k_d, 3, 40, 40)
    print("KERNEL_OK")
</pallas_src>

<mosaic_0001>
module attributes {stable_mosaic.version = 11 : i64} {
  func.func @_fused_forward_kernel(%arg0: memref<288x256xbf16, #tpu.memory_space<vmem>>, %arg1: memref<2x2xf32, #tpu.memory_space<vmem>>, %arg2: memref<256x32xbf16, #tpu.memory_space<vmem>>, %arg3: memref<1x32xf32, #tpu.memory_space<vmem>>, %arg4: memref<512x64xbf16, #tpu.memory_space<vmem>>, %arg5: memref<1x64xf32, #tpu.memory_space<vmem>>, %arg6: memref<576x64xbf16, #tpu.memory_space<vmem>>, %arg7: memref<1x64xf32, #tpu.memory_space<vmem>>, %arg8: memref<64x512xbf16, #tpu.memory_space<vmem>>, %arg9: memref<2x512xf32, #tpu.memory_space<vmem>>, %arg10: memref<1x512xf32, #tpu.memory_space<vmem>>, %arg11: memref<512x128xbf16, #tpu.memory_space<vmem>>, %arg12: memref<1x128xf32, #tpu.memory_space<vmem>>, %arg13: memref<2x128xf32, #tpu.memory_space<vmem>>) attributes {dimension_semantics = [], scalar_prefetch = 0 : i64, scratch_operands = 0 : i64, tpu.core_type = #tpu.core_type<tc>} {
    %c0 = arith.constant 0 : index
    %c0_0 = arith.constant 0 : index
    %0 = vector.load %arg0[%c0, %c0_0] : memref<288x256xbf16, #tpu.memory_space<vmem>>, vector<288x256xbf16>
    %c0_1 = arith.constant 0 : index
    %c0_2 = arith.constant 0 : index
    %1 = vector.load %arg2[%c0_1, %c0_2] : memref<256x32xbf16, #tpu.memory_space<vmem>>, vector<256x32xbf16>
    %cst = arith.constant dense<0.000000e+00> : vector<288x32xf32>
    %2 = tpu.matmul %0, %1, %cst {dimension_numbers = #tpu.dot_dimension_numbers<[1], [0], [0], [1], [0, 0, 1, 1], [], []>} : vector<288x256xbf16>, vector<256x32xbf16>, vector<288x32xf32> -> vector<288x32xf32>
    %c0_3 = arith.constant 0 : index
    %c0_4 = arith.constant 0 : index
    %3 = vector.load %arg3[%c0_3, %c0_4] : memref<1x32xf32, #tpu.memory_space<vmem>>, vector<1x32xf32>
    %4 = vector.broadcast %3 : vector<1x32xf32> to vector<288x32xf32>
    %5 = arith.addf %2, %4 : vector<288x32xf32>
    %cst_5 = arith.constant 0.000000e+00 : f32
    %6 = vector.broadcast %cst_5 : f32 to vector<288x32xf32>
    %7 = arith.maximumf %5, %6 : vector<288x32xf32>
    %8 = arith.truncf %7 : vector<288x32xf32> to vector<288x32xbf16>
    %c0_6 = arith.constant 0 : index
    %c0_7 = arith.constant 0 : index
    %9 = vector.load %arg5[%c0_6, %c0_7] : memref<1x64xf32, #tpu.memory_space<vmem>>, vector<1x64xf32>
    %10 = vector.extract_strided_slice %8 {offsets = [0, 0], sizes = [18, 32], strides = [1, 1]} : vector<288x32xbf16> to vector<18x32xbf16>
    %c0_8 = arith.constant 0 : index
    %c0_9 = arith.constant 0 : index
    %11 = vector.load %arg4[%c0_8, %c0_9] : memref<512x64xbf16, #tpu.memory_space<vmem>>, vector<32x64xbf16>
    %cst_10 = arith.constant dense<0.000000e+00> : vector<18x64xf32>
    %12 = tpu.matmul %10, %11, %cst_10 {dimension_numbers = #tpu.dot_dimension_numbers<[1], [0], [0], [1], [0, 0, 1, 1], [], []>} : vector<18x32xbf16>, vector<32x64xbf16>, vector<18x64xf32> -> vector<18x64xf32>
    %13 = vector.broadcast %9 : vector<1x64xf32> to vector<18x64xf32>
    %14 = arith.addf %13, %12 : vector<18x64xf32>
    %15 = vector.extract_strided_slice %8 {offsets = [18, 0], sizes = [18, 32], strides = [1, 1]} : vector<288x32xbf16> to vector<18x32xbf16>
    %c32 = arith.constant 32 : index
    %c0_11 = arith.constant 0 : index
    %16 = vector.load %arg4[%c32, %c0_11] : memref<512x64xbf16, #tpu.memory_space<vmem>>, vector<32x64xbf16>
    %cst_12 = arith.constant dense<0.000000e+00> : vector<18x64xf32>
    %17 = tpu.matmul %15, %16, %cst_12 {dimension_numbers = #tpu.dot_dimension_numbers<[1], [0], [0], [1], [0, 0, 1, 1], [], []>} : vector<18x32xbf16>, vector<32x64xbf16>, vector<18x64xf32> -> vector<18x64xf32>
    %18 = arith.addf %14, %17 : vector<18x64xf32>
    %19 = vector.extract_strided_slice %8 {offsets = [36, 0], sizes = [18, 32], strides = [1, 1]} : vector<288x32xbf16> to vector<18x32xbf16>
    %c64 = arith.constant 64 : index
    %c0_13 = arith.constant 0 : index
    %20 = vector.load %arg4[%c64, %c0_13] : memref<512x64xbf16, #tpu.memory_space<vmem>>, vector<32x64xbf16>
    %cst_14 = arith.constant dense<0.000000e+00> : vector<18x64xf32>
    %21 = tpu.matmul %19, %20, %cst_14 {dimension_numbers = #tpu.dot_dimension_numbers<[1], [0], [0], [1], [0, 0, 1, 1], [], []>} : vector<18x32xbf16>, vector<32x64xbf16>, vector<18x64xf32> -> vector<18x64xf32>
    %22 = arith.addf %18, %21 : vector<18x64xf32>
    %23 = vector.extract_strided_slice %8 {offsets = [54, 0], sizes = [18, 32], strides = [1, 1]} : vector<288x32xbf16> to vector<18x32xbf16>
    %c96 = arith.constant 96 : index
    %c0_15 = arith.constant 0 : index
    %24 = vector.load %arg4[%c96, %c0_15] : memref<512x64xbf16, #tpu.memory_space<vmem>>, vector<32x64xbf16>
    %cst_16 = arith.constant dense<0.000000e+00> : vector<18x64xf32>
    %25 = tpu.matmul %23, %24, %cst_16 {dimension_numbers = #tpu.dot_dimension_numbers<[1], [0], [0], [1], [0, 0, 1, 1], [], []>} : vector<18x32xbf16>, vector<32x64xbf16>, vector<18x64xf32> -> vector<18x64xf32>
    %26 = arith.addf %22, %25 : vector<18x64xf32>
    %27 = vector.extract_strided_slice %8 {offsets = [72, 0], sizes = [18, 32], strides = [1, 1]} : vector<288x32xbf16> to vector<18x32xbf16>
    %c128 = arith.constant 128 : index
    %c0_17 = arith.constant 0 : index
    %28 = vector.load %arg4[%c128, %c0_17] : memref<512x64xbf16, #tpu.memory_space<vmem>>, vector<32x64xbf16>
    %cst_18 = arith.constant dense<0.000000e+00> : vector<18x64xf32>
    %29 = tpu.matmul %27, %28, %cst_18 {dimension_numbers = #tpu.dot_dimension_numbers<[1], [0], [0], [1], [0, 0, 1, 1], [], []>} : vector<18x32xbf16>, vector<32x64xbf16>, vector<18x64xf32> -> vector<18x64xf32>
    %30 = arith.addf %26, %29 : vector<18x64xf32>
    %31 = vector.extract_strided_slice %8 {offsets = [90, 0], sizes = [18, 32], strides = [1, 1]} : vector<288x32xbf16> to vector<18x32xbf16>
    %c160 = arith.constant 160 : index
    %c0_19 = arith.constant 0 : index
    %32 = vector.load %arg4[%c160, %c0_19] : memref<512x64xbf16, #tpu.memory_space<vmem>>, vector<32x64xbf16>
    %cst_20 = arith.constant dense<0.000000e+00> : vector<18x64xf32>
    %33 = tpu.matmul %31, %32, %cst_20 {dimension_numbers = #tpu.dot_dimension_numbers<[1], [0], [0], [1], [0, 0, 1, 1], [], []>} : vector<18x32xbf16>, vector<32x64xbf16>, vector<18x64xf32> -> vector<18x64xf32>
    %34 = arith.addf %30, %33 : vector<18x64xf32>
    %35 = vector.extract_strided_slice %8 {offsets = [108, 0], sizes = [18, 32], strides = [1, 1]} : vector<288x32xbf16> to vector<18x32xbf16>
    %c192 = arith.constant 192 : index
    %c0_21 = arith.constant 0 : index
    %36 = vector.load %arg4[%c192, %c0_21] : memref<512x64xbf16, #tpu.memory_space<vmem>>, vector<32x64xbf16>
    %cst_22 = arith.constant dense<0.000000e+00> : vector<18x64xf32>
    %37 = tpu.matmul %35, %36, %cst_22 {dimension_numbers = #tpu.dot_dimension_numbers<[1], [0], [0], [1], [0, 0, 1, 1], [], []>} : vector<18x32xbf16>, vector<32x64xbf16>, vector<18x64xf32> -> vector<18x64xf32>
    %38 = arith.addf %34, %37 : vector<18x64xf32>
    %39 = vector.extract_strided_slice %8 {offsets = [126, 0], sizes = [18, 32], strides = [1, 1]} : vector<288x32xbf16> to vector<18x32xbf16>
    %c224 = arith.constant 224 : index
    %c0_23 = arith.constant 0 : index
    %40 = vector.load %arg4[%c224, %c0_23] : memref<512x64xbf16, #tpu.memory_space<vmem>>, vector<32x64xbf16>
    %cst_24 = arith.constant dense<0.000000e+00> : vector<18x64xf32>
    %41 = tpu.matmul %39, %40, %cst_24 {dimension_numbers = #tpu.dot_dimension_numbers<[1], [0], [0], [1], [0, 0, 1, 1], [], []>} : vector<18x32xbf16>, vector<32x64xbf16>, vector<18x64xf32> -> vector<18x64xf32>
    %42 = arith.addf %38, %41 : vector<18x64xf32>
    %43 = vector.extract_strided_slice %8 {offsets = [144, 0], sizes = [18, 32], strides = [1, 1]} : vector<288x32xbf16> to vector<18x32xbf16>
    %c256 = arith.constant 256 : index
    %c0_25 = arith.constant 0 : index
    %44 = vector.load %arg4[%c256, %c0_25] : memref<512x64xbf16, #tpu.memory_space<vmem>>, vector<32x64xbf16>
    %cst_26 = arith.constant dense<0.000000e+00> : vector<18x64xf32>
    %45 = tpu.matmul %43, %44, %cst_26 {dimension_numbers = #tpu.dot_dimension_numbers<[1], [0], [0], [1], [0, 0, 1, 1], [], []>} : vector<18x32xbf16>, vector<32x64xbf16>, vector<18x64xf32> -> vector<18x64xf32>
    %46 = arith.addf %42, %45 : vector<18x64xf32>
    %47 = vector.extract_strided_slice %8 {offsets = [162, 0], sizes = [18, 32], strides = [1, 1]} : vector<288x32xbf16> to vector<18x32xbf16>
    %c288 = arith.constant 288 : index
    %c0_27 = arith.constant 0 : index
    %48 = vector.load %arg4[%c288, %c0_27] : memref<512x64xbf16, #tpu.memory_space<vmem>>, vector<32x64xbf16>
    %cst_28 = arith.constant dense<0.000000e+00> : vector<18x64xf32>
    %49 = tpu.matmul %47, %48, %cst_28 {dimension_numbers = #tpu.dot_dimension_numbers<[1], [0], [0], [1], [0, 0, 1, 1], [], []>} : vector<18x32xbf16>, vector<32x64xbf16>, vector<18x64xf32> -> vector<18x64xf32>
    %50 = arith.addf %46, %49 : vector<18x64xf32>
    %51 = vector.extract_strided_slice %8 {offsets = [180, 0], sizes = [18, 32], strides = [1, 1]} : vector<288x32xbf16> to vector<18x32xbf16>
    %c320 = arith.constant 320 : index
    %c0_29 = arith.constant 0 : index
    %52 = vector.load %arg4[%c320, %c0_29] : memref<512x64xbf16, #tpu.memory_space<vmem>>, vector<32x64xbf16>
    %cst_30 = arith.constant dense<0.000000e+00> : vector<18x64xf32>
    %53 = tpu.matmul %51, %52, %cst_30 {dimension_numbers = #tpu.dot_dimension_numbers<[1], [0], [0], [1], [0, 0, 1, 1], [], []>} : vector<18x32xbf16>, vector<32x64xbf16>, vector<18x64xf32> -> vector<18x64xf32>
    %54 = arith.addf %50, %53 : vector<18x64xf32>
    %55 = vector.extract_strided_slice %8 {offsets = [198, 0], sizes = [18, 32], strides = [1, 1]} : vector<288x32xbf16> to vector<18x32xbf16>
    %c352 = arith.constant 352 : index
    %c0_31 = arith.constant 0 : index
    %56 = vector.load %arg4[%c352, %c0_31] : memref<512x64xbf16, #tpu.memory_space<vmem>>, vector<32x64xbf16>
    %cst_32 = arith.constant dense<0.000000e+00> : vector<18x64xf32>
    %57 = tpu.matmul %55, %56, %cst_32 {dimension_numbers = #tpu.dot_dimension_numbers<[1], [0], [0], [1], [0, 0, 1, 1], [], []>} : vector<18x32xbf16>, vector<32x64xbf16>, vector<18x64xf32> -> vector<18x64xf32>
    %58 = arith.addf %54, %57 : vector<18x64xf32>
    %59 = vector.extract_strided_slice %8 {offsets = [216, 0], sizes = [18, 32], strides = [1, 1]} : vector<288x32xbf16> to vector<18x32xbf16>
    %c384 = arith.constant 384 : index
    %c0_33 = arith.constant 0 : index
    %60 = vector.load %arg4[%c384, %c0_33] : memref<512x64xbf16, #tpu.memory_space<vmem>>, vector<32x64xbf16>
    %cst_34 = arith.constant dense<0.000000e+00> : vector<18x64xf32>
    %61 = tpu.matmul %59, %60, %cst_34 {dimension_numbers = #tpu.dot_dimension_numbers<[1], [0], [0], [1], [0, 0, 1, 1], [], []>} : vector<18x32xbf16>, vector<32x64xbf16>, vector<18x64xf32> -> vector<18x64xf32>
    %62 = arith.addf %58, %61 : vector<18x64xf32>
    %63 = vector.extract_strided_slice %8 {offsets = [234, 0], sizes = [18, 32], strides = [1, 1]} : vector<288x32xbf16> to vector<18x32xbf16>
    %c416 = arith.constant 416 : index
    %c0_35 = arith.constant 0 : index
    %64 = vector.load %arg4[%c416, %c0_35] : memref<512x64xbf16, #tpu.memory_space<vmem>>, vector<32x64xbf16>
    %cst_36 = arith.constant dense<0.000000e+00> : vector<18x64xf32>
    %65 = tpu.matmul %63, %64, %cst_36 {dimension_numbers = #tpu.dot_dimension_numbers<[1], [0], [0], [1], [0, 0, 1, 1], [], []>} : vector<18x32xbf16>, vector<32x64xbf16>, vector<18x64xf32> -> vector<18x64xf32>
    %66 = arith.addf %62, %65 : vector<18x64xf32>
    %67 = vector.extract_strided_slice %8 {offsets = [252, 0], sizes = [18, 32], strides = [1, 1]} : vector<288x32xbf16> to vector<18x32xbf16>
    %c448 = arith.constant 448 : index
    %c0_37 = arith.constant 0 : index
    %68 = vector.load %arg4[%c448, %c0_37] : memref<512x64xbf16, #tpu.memory_space<vmem>>, vector<32x64xbf16>
    %cst_38 = arith.constant dense<0.000000e+00> : vector<18x64xf32>
    %69 = tpu.matmul %67, %68, %cst_38 {dimension_numbers = #tpu.dot_dimension_numbers<[1], [0], [0], [1], [0, 0, 1, 1], [], []>} : vector<18x32xbf16>, vector<32x64xbf16>, vector<18x64xf32> -> vector<18x64xf32>
    %70 = arith.addf %66, %69 : vector<18x64xf32>
    %71 = vector.extract_strided_slice %8 {offsets = [270, 0], sizes = [18, 32], strides = [1, 1]} : vector<288x32xbf16> to vector<18x32xbf16>
    %c480 = arith.constant 480 : index
    %c0_39 = arith.constant 0 : index
    %72 = vector.load %arg4[%c480, %c0_39] : memref<512x64xbf16, #tpu.memory_space<vmem>>, vector<32x64xbf16>
    %cst_40 = arith.constant dense<0.000000e+00> : vector<18x64xf32>
    %73 = tpu.matmul %71, %72, %cst_40 {dimension_numbers = #tpu.dot_dimension_numbers<[1], [0], [0], [1], [0, 0, 1, 1], [], []>} : vector<18x32xbf16>, vector<32x64xbf16>, vector<18x64xf32> -> vector<18x64xf32>
    %74 = arith.addf %70, %73 : vector<18x64xf32>
    %cst_41 = arith.constant 0.000000e+00 : f32
    %75 = vector.broadcast %cst_41 : f32 to vector<18x64xf32>
    %76 = arith.maximumf %74, %75 : vector<18x64xf32>
    %77 = arith.truncf %76 : vector<18x64xf32> to vector<18x64xbf16>
    %78 = vector.extract_strided_slice %77 {offsets = [0, 0], sizes = [2, 64], strides = [1, 1]} : vector<18x64xbf16> to vector<2x64xbf16>
    %79 = vector.extract_strided_slice %77 {offsets = [2, 0], sizes = [2, 64], strides = [1, 1]} : vector<18x64xbf16> to vector<2x64xbf16>
    %80 = vector.extract_strided_slice %77 {offsets = [4, 0], sizes = [2, 64], strides = [1, 1]} : vector<18x64xbf16> to vector<2x64xbf16>
    %81 = vector.extract_strided_slice %77 {offsets = [6, 0], sizes = [2, 64], strides = [1, 1]} : vector<18x64xbf16> to vector<2x64xbf16>
    %82 = vector.extract_strided_slice %77 {offsets = [8, 0], sizes = [2, 64], strides = [1, 1]} : vector<18x64xbf16> to vector<2x64xbf16>
    %83 = vector.extract_strided_slice %77 {offsets = [10, 0], sizes = [2, 64], strides = [1, 1]} : vector<18x64xbf16> to vector<2x64xbf16>
    %84 = vector.extract_strided_slice %77 {offsets = [12, 0], sizes = [2, 64], strides = [1, 1]} : vector<18x64xbf16> to vector<2x64xbf16>
    %85 = vector.extract_strided_slice %77 {offsets = [14, 0], sizes = [2, 64], strides = [1, 1]} : vector<18x64xbf16> to vector<2x64xbf16>
    %86 = vector.extract_strided_slice %77 {offsets = [16, 0], sizes = [2, 64], strides = [1, 1]} : vector<18x64xbf16> to vector<2x64xbf16>
    %87 = tpu.concatenate %78, %79, %80, %81, %82, %83, %84, %85, %86 in 1 : vector<2x64xbf16>, vector<2x64xbf16>, vector<2x64xbf16>, vector<2x64xbf16>, vector<2x64xbf16>, vector<2x64xbf16>, vector<2x64xbf16>, vector<2x64xbf16>, vector<2x64xbf16> -> vector<2x576xbf16>
    %c0_42 = arith.constant 0 : index
    %c0_43 = arith.constant 0 : index
    %88 = vector.load %arg6[%c0_42, %c0_43] : memref<576x64xbf16, #tpu.memory_space<vmem>>, vector<576x64xbf16>
    %cst_44 = arith.constant dense<0.000000e+00> : vector<2x64xf32>
    %89 = tpu.matmul %87, %88, %cst_44 {dimension_numbers = #tpu.dot_dimension_numbers<[1], [0], [0], [1], [0, 0, 1, 1], [], []>} : vector<2x576xbf16>, vector<576x64xbf16>, vector<2x64xf32> -> vector<2x64xf32>
    %c0_45 = arith.constant 0 : index
    %c0_46 = arith.constant 0 : index
    %90 = vector.load %arg7[%c0_45, %c0_46] : memref<1x64xf32, #tpu.memory_space<vmem>>, vector<1x64xf32>
    %91 = vector.broadcast %90 : vector<1x64xf32> to vector<2x64xf32>
    %92 = arith.addf %89, %91 : vector<2x64xf32>
    %cst_47 = arith.constant 0.000000e+00 : f32
    %93 = vector.broadcast %cst_47 : f32 to vector<2x64xf32>
    %94 = arith.maximumf %92, %93 : vector<2x64xf32>
    %95 = arith.truncf %94 : vector<2x64xf32> to vector<2x64xbf16>
    %c0_48 = arith.constant 0 : index
    %c0_49 = arith.constant 0 : index
    %96 = vector.load %arg8[%c0_48, %c0_49] : memref<64x512xbf16, #tpu.memory_space<vmem>>, vector<64x512xbf16>
    %cst_50 = arith.constant dense<0.000000e+00> : vector<2x512xf32>
    %97 = tpu.matmul %95, %96, %cst_50 {dimension_numbers = #tpu.dot_dimension_numbers<[1], [0], [0], [1], [0, 0, 1, 1], [], []>} : vector<2x64xbf16>, vector<64x512xbf16>, vector<2x512xf32> -> vector<2x512xf32>
    %c0_51 = arith.constant 0 : index
    %c0_52 = arith.constant 0 : index
    %98 = vector.load %arg1[%c0_51, %c0_52] : memref<2x2xf32, #tpu.memory_space<vmem>>, vector<2x2xf32>
    %99 = vector.extract_strided_slice %98 {offsets = [0, 0], sizes = [2, 1], strides = [1, 1]} : vector<2x2xf32> to vector<2x1xf32>
    %c0_53 = arith.constant 0 : index
    %c0_54 = arith.constant 0 : index
    %100 = vector.load %arg9[%c0_53, %c0_54] : memref<2x512xf32, #tpu.memory_space<vmem>>, vector<1x512xf32>
    %101 = vector.broadcast %99 : vector<2x1xf32> to vector<2x512xf32>
    %102 = vector.broadcast %100 : vector<1x512xf32> to vector<2x512xf32>
    %103 = arith.mulf %101, %102 : vector<2x512xf32>
    %104 = arith.addf %97, %103 : vector<2x512xf32>
    %105 = vector.extract_strided_slice %98 {offsets = [0, 1], sizes = [2, 1], strides = [1, 1]} : vector<2x2xf32> to vector<2x1xf32>
    %c1 = arith.constant 1 : index
    %c0_55 = arith.constant 0 : index
    %106 = vector.load %arg9[%c1, %c0_55] : memref<2x512xf32, #tpu.memory_space<vmem>>, vector<1x512xf32>
    %107 = vector.broadcast %105 : vector<2x1xf32> to vector<2x512xf32>
    %108 = vector.broadcast %106 : vector<1x512xf32> to vector<2x512xf32>
    %109 = arith.mulf %107, %108 : vector<2x512xf32>
    %110 = arith.addf %104, %109 : vector<2x512xf32>
    %c0_56 = arith.constant 0 : index
    %c0_57 = arith.constant 0 : index
    %111 = vector.load %arg10[%c0_56, %c0_57] : memref<1x512xf32, #tpu.memory_space<vmem>>, vector<1x512xf32>
    %112 = vector.broadcast %111 : vector<1x512xf32> to vector<2x512xf32>
    %113 = arith.addf %110, %112 : vector<2x512xf32>
    %cst_58 = arith.constant 0.000000e+00 : f32
    %114 = vector.broadcast %cst_58 : f32 to vector<2x512xf32>
    %115 = arith.maximumf %113, %114 : vector<2x512xf32>
    %116 = arith.truncf %115 : vector<2x512xf32> to vector<2x512xbf16>
    %c0_59 = arith.constant 0 : index
    %c0_60 = arith.constant 0 : index
    %117 = vector.load %arg11[%c0_59, %c0_60] : memref<512x128xbf16, #tpu.memory_space<vmem>>, vector<512x128xbf16>
    %cst_61 = arith.constant dense<0.000000e+00> : vector<2x128xf32>
    %118 = tpu.matmul %116, %117, %cst_61 {dimension_numbers = #tpu.dot_dimension_numbers<[1], [0], [0], [1], [0, 0, 1, 1], [], []>} : vector<2x512xbf16>, vector<512x128xbf16>, vector<2x128xf32> -> vector<2x128xf32>
    %c0_62 = arith.constant 0 : index
    %c0_63 = arith.constant 0 : index
    %119 = vector.load %arg12[%c0_62, %c0_63] : memref<1x128xf32, #tpu.memory_space<vmem>>, vector<1x128xf32>
    %120 = vector.broadcast %119 : vector<1x128xf32> to vector<2x128xf32>
    %121 = arith.addf %118, %120 : vector<2x128xf32>
    %c0_64 = arith.constant 0 : index
    %c0_65 = arith.constant 0 : index
    %122 = vector.load %arg13[%c0_64, %c0_65] : memref<2x128xf32, #tpu.memory_space<vmem>>, vector<2x128xf32>
    tpu.vector_store %arg13[%c0_64, %c0_65], %121 {strides = array<i32>} : memref<2x128xf32, #tpu.memory_space<vmem>>, vector<2x128xf32>,
    return
  }
}

</mosaic_0001>

<llo_original>
// kernel: fsa_dqn_forward.1
$region0: #{fsa_dqn_forward.1}
  #allocation0 [shape = 'u32[]', space=smem, size = 0x4, offset = 0x4, fixed_abs, tag = 'smem constant byte address 0x4 - core index']
  #allocation1 [shape = 'u32[144,128]{1,0:T(1,128)}', space=vmem, size = 0x12000, scoped, tag = 'internal scratch']
  %s0 = inlined_call_operand.vmem [shape: bf16[288,256], index: 0, kind: input, shape index: {}]
  %s1 = inlined_call_operand.vmem [shape: f32[2,2], index: 1, kind: input, shape index: {}]
  %s2 = inlined_call_operand.vmem [shape: bf16[256,32], index: 2, kind: input, shape index: {}]
  %s3 = inlined_call_operand.vmem [shape: f32[1,32], index: 3, kind: input, shape index: {}]
  %s4 = inlined_call_operand.vmem [shape: bf16[512,64], index: 4, kind: input, shape index: {}]
  %s5 = inlined_call_operand.vmem [shape: f32[1,64], index: 5, kind: input, shape index: {}]
  %s6 = inlined_call_operand.vmem [shape: bf16[576,64], index: 6, kind: input, shape index: {}]
  %s7 = inlined_call_operand.vmem [shape: f32[1,64], index: 7, kind: input, shape index: {}]
  %s8 = inlined_call_operand.vmem [shape: bf16[64,512], index: 8, kind: input, shape index: {}]
  %s9 = inlined_call_operand.vmem [shape: f32[2,512], index: 9, kind: input, shape index: {}]
  %s10 = inlined_call_operand.vmem [shape: f32[1,512], index: 10, kind: input, shape index: {}]
  %s11 = inlined_call_operand.vmem [shape: bf16[512,128], index: 11, kind: input, shape index: {}]
  %s12 = inlined_call_operand.vmem [shape: f32[1,128], index: 12, kind: input, shape index: {}]
  %s13 = inlined_call_operand.hbm [shape: f32[2,128], index: 13, kind: output, shape index: {}]
  %s14 = sld [smem:[#allocation0]]
  $region62: #{fsa_dqn_forward.1} parent=0
    _
  %s16 = ssub.s32 1, %s14
  %s17 = scalar_select 0, %s16, %s14
  $region1: #{fsa_dqn_forward.1} parent=0
    #allocation2 [shape = 'u8[1024]{0}', space=vmem, size = 0x400, scoped, tag = 'output window, operand 0, single buffered']
    #allocation3 [shape = 's32[1]{0}', space=sflag, size = 0x4, scoped, tag = 'scoped memory for fsa_dqn_forward.1']
    %18 = vsyncpa [#allocation3], 0
    // Predicated region
    $region2: #{fsa_dqn_forward.1} parent=1 // pred_check
      _
    $region3: #{fsa_dqn_forward.1} parent=1 // pred_check_branch
      %20 = sbr.rel (0) target = $region5
    $region4: #{fsa_dqn_forward.1} parent=1 // pred_region
      _
    $region5: #{fsa_dqn_forward.1} parent=1 // pred_fallthru
      _
    // Predicated region
    $region6: #{fsa_dqn_forward.1} parent=1 // pred_check
      _
    $region7: #{fsa_dqn_forward.1} parent=1 // pred_check_branch
      %22 = sbr.rel (0) target = $region9
    $region8: #{fsa_dqn_forward.1} parent=1 // pred_region
      _
    $region9: #{fsa_dqn_forward.1} parent=1 // pred_fallthru
      _
    // Predicated region
    $region10: #{fsa_dqn_forward.1} parent=1 // pred_check
      _
    $region11: #{fsa_dqn_forward.1} parent=1 // pred_check_branch
      %24 = sbr.rel (0) target = $region13
    $region12: #{fsa_dqn_forward.1} parent=1 // pred_region
      _
    $region13: #{fsa_dqn_forward.1} parent=1 // pred_fallthru
      _
    // Predicated region
    $region14: #{fsa_dqn_forward.1} parent=1 // pred_check
      _
    $region15: #{fsa_dqn_forward.1} parent=1 // pred_check_branch
      %26 = sbr.rel (0) target = $region17
    $region16: #{fsa_dqn_forward.1} parent=1 // pred_region
      _
    $region17: #{fsa_dqn_forward.1} parent=1 // pred_fallthru
      _
    // Predicated region
    $region18: #{fsa_dqn_forward.1} parent=1 // pred_check
      _
    $region19: #{fsa_dqn_forward.1} parent=1 // pred_check_branch
      %28 = sbr.rel (0) target = $region21
    $region20: #{fsa_dqn_forward.1} parent=1 // pred_region
      _
    $region21: #{fsa_dqn_forward.1} parent=1 // pred_fallthru
      _
    // Predicated region
    $region22: #{fsa_dqn_forward.1} parent=1 // pred_check
      _
    $region23: #{fsa_dqn_forward.1} parent=1 // pred_check_branch
      %30 = sbr.rel (0) target = $region25
    $region24: #{fsa_dqn_forward.1} parent=1 // pred_region
      _
    $region25: #{fsa_dqn_forward.1} parent=1 // pred_fallthru
      _
    // Predicated region
    $region26: #{fsa_dqn_forward.1} parent=1 // pred_check
      _
    $region27: #{fsa_dqn_forward.1} parent=1 // pred_check_branch
      %32 = sbr.rel (0) target = $region29
    $region28: #{fsa_dqn_forward.1} parent=1 // pred_region
      _
    $region29: #{fsa_dqn_forward.1} parent=1 // pred_fallthru
      _
    // Predicated region
    $region30: #{fsa_dqn_forward.1} parent=1 // pred_check
      _
    $region31: #{fsa_dqn_forward.1} parent=1 // pred_check_branch
      %34 = sbr.rel (0) target = $region33
    $region32: #{fsa_dqn_forward.1} parent=1 // pred_region
      _
    $region33: #{fsa_dqn_forward.1} parent=1 // pred_fallthru
      _
    // Predicated region
    $region34: #{fsa_dqn_forward.1} parent=1 // pred_check
      _
    $region35: #{fsa_dqn_forward.1} parent=1 // pred_check_branch
      %36 = sbr.rel (0) target = $region37
    $region36: #{fsa_dqn_forward.1} parent=1 // pred_region
      _
    $region37: #{fsa_dqn_forward.1} parent=1 // pred_fallthru
      _
    // Predicated region
    $region38: #{fsa_dqn_forward.1} parent=1 // pred_check
      _
    $region39: #{fsa_dqn_forward.1} parent=1 // pred_check_branch
      %38 = sbr.rel (0) target = $region41
    $region40: #{fsa_dqn_forward.1} parent=1 // pred_region
      _
    $region41: #{fsa_dqn_forward.1} parent=1 // pred_fallthru
      _
    // Predicated region
    $region42: #{fsa_dqn_forward.1} parent=1 // pred_check
      _
    $region43: #{fsa_dqn_forward.1} parent=1 // pred_check_branch
      %40 = sbr.rel (0) target = $region45
    $region44: #{fsa_dqn_forward.1} parent=1 // pred_region
      _
    $region45: #{fsa_dqn_forward.1} parent=1 // pred_fallthru
      _
    // Predicated region
    $region46: #{fsa_dqn_forward.1} parent=1 // pred_check
      _
    $region47: #{fsa_dqn_forward.1} parent=1 // pred_check_branch
      %42 = sbr.rel (0) target = $region49
    $region48: #{fsa_dqn_forward.1} parent=1 // pred_region
      _
    $region49: #{fsa_dqn_forward.1} parent=1 // pred_fallthru
      _
    // Predicated region
    $region50: #{fsa_dqn_forward.1} parent=1 // pred_check
      _
    $region51: #{fsa_dqn_forward.1} parent=1 // pred_check_branch
      %44 = sbr.rel (0) target = $region53
    $region52: #{fsa_dqn_forward.1} parent=1 // pred_region
      _
    $region53: #{fsa_dqn_forward.1} parent=1 // pred_fallthru
      _
    %v46 = vld [vmem:[%s0] sm:$0xff]
    %v47 = vld [vmem:[%s0 + $0x8] sm:$0xff]
    %v48 = vld [vmem:[%s0 + $0x10] sm:$0xff]
    %v49 = vld [vmem:[%s0 + $0x18] sm:$0xff]
    %v50 = vld [vmem:[%s0 + $0x20] sm:$0xff]
    %v51 = vld [vmem:[%s0 + $0x28] sm:$0xff]
    %v52 = vld [vmem:[%s0 + $0x30] sm:$0xff]
    %v53 = vld [vmem:[%s0 + $0x38] sm:$0xff]
    %v54 = vld [vmem:[%s0 + $0x40] sm:$0xff]
    %v55 = vld [vmem:[%s0 + $0x48] sm:$0xff]
    %v56 = vld [vmem:[%s0 + $0x50] sm:$0xff]
    %v57 = vld [vmem:[%s0 + $0x58] sm:$0xff]
    %v58 = vld [vmem:[%s0 + $0x60] sm:$0xff]
    %v59 = vld [vmem:[%s0 + $0x68] sm:$0xff]
    %v60 = vld [vmem:[%s0 + $0x70] sm:$0xff]
    %v61 = vld [vmem:[%s0 + $0x78] sm:$0xff]
    %v62 = vld [vmem:[%s0 + $0x80] sm:$0xff]
    %v63 = vld [vmem:[%s0 + $0x88] sm:$0xff]
    %v64 = vld [vmem:[%s0 + $0x90] sm:$0xff]
    %v65 = vld [vmem:[%s0 + $0x98] sm:$0xff]
    %v66 = vld [vmem:[%s0 + $0xa0] sm:$0xff]
    %v67 = vld [vmem:[%s0 + $0xa8] sm:$0xff]
    %v68 = vld [vmem:[%s0 + $0xb0] sm:$0xff]
    %v69 = vld [vmem:[%s0 + $0xb8] sm:$0xff]
    %v70 = vld [vmem:[%s0 + $0xc0] sm:$0xff]
    %v71 = vld [vmem:[%s0 + $0xc8] sm:$0xff]
    %v72 = vld [vmem:[%s0 + $0xd0] sm:$0xff]
    %v73 = vld [vmem:[%s0 + $0xd8] sm:$0xff]
    %v74 = vld [vmem:[%s0 + $0xe0] sm:$0xff]
    %v75 = vld [vmem:[%s0 + $0xe8] sm:$0xff]
    %v76 = vld [vmem:[%s0 + $0xf0] sm:$0xff]
    %v77 = vld [vmem:[%s0 + $0xf8] sm:$0xff]
    %v78 = vld [vmem:[%s0 + $0x100] sm:$0xff]
    %v79 = vld [vmem:[%s0 + $0x108] sm:$0xff]
    %v80 = vld [vmem:[%s0 + $0x110] sm:$0xff]
    %v81 = vld [vmem:[%s0 + $0x118] sm:$0xff]
    %v82 = vld [vmem:[%s2] sm:$0xf]
    %v83 = vld [vmem:[%s2 + $0x4] sm:$0xf]
    %v84 = vld [vmem:[%s2 + $0x8] sm:$0xf]
    %v85 = vld [vmem:[%s2 + $0xc] sm:$0xf]
    %v86 = vld [vmem:[%s2 + $0x10] sm:$0xf]
    %v87 = vld [vmem:[%s2 + $0x14] sm:$0xf]
    %v88 = vld [vmem:[%s2 + $0x18] sm:$0xf]
    %v89 = vld [vmem:[%s2 + $0x1c] sm:$0xf]
    %v90 = vld [vmem:[%s2 + $0x20] sm:$0xf]
    %v91 = vld [vmem:[%s2 + $0x24] sm:$0xf]
    %v92 = vld [vmem:[%s2 + $0x28] sm:$0xf]
    %v93 = vld [vmem:[%s2 + $0x2c] sm:$0xf]
    %v94 = vld [vmem:[%s2 + $0x30] sm:$0xf]
    %v95 = vld [vmem:[%s2 + $0x34] sm:$0xf]
    %v96 = vld [vmem:[%s2 + $0x38] sm:$0xf]
    %v97 = vld [vmem:[%s2 + $0x3c] sm:$0xf]
    %v98 = vld [vmem:[%s2 + $0x40] sm:$0xf]
    %v99 = vld [vmem:[%s2 + $0x44] sm:$0xf]
    %v100 = vld [vmem:[%s2 + $0x48] sm:$0xf]
    %v101 = vld [vmem:[%s2 + $0x4c] sm:$0xf]
    %v102 = vld [vmem:[%s2 + $0x50] sm:$0xf]
    %v103 = vld [vmem:[%s2 + $0x54] sm:$0xf]
    %v104 = vld [vmem:[%s2 + $0x58] sm:$0xf]
    %v105 = vld [vmem:[%s2 + $0x5c] sm:$0xf]
    %v106 = vld [vmem:[%s2 + $0x60] sm:$0xf]
    %v107 = vld [vmem:[%s2 + $0x64] sm:$0xf]
    %v108 = vld [vmem:[%s2 + $0x68] sm:$0xf]
    %v109 = vld [vmem:[%s2 + $0x6c] sm:$0xf]
    %v110 = vld [vmem:[%s2 + $0x70] sm:$0xf]
    %v111 = vld [vmem:[%s2 + $0x74] sm:$0xf]
    %v112 = vld [vmem:[%s2 + $0x78] sm:$0xf]
    %v113 = vld [vmem:[%s2 + $0x7c] sm:$0xf]
    %v114 = vld [vmem:[%s3] sm:$0x1]
    %v116 = vlaneseq
    %v117 = vshrl.u32 %v116, 7
    %v118 = vsub.s32 0, %v117
    %v119 = vrot.slane %v114, %v118
    %v157 = vunpack.c.l.b16 %v46
    %v158 = vunpack.c.h.b16 %v46
    %v159 = vunpack.c.l.b16 %v47
    %v160 = vunpack.c.h.b16 %v47
    %v161 = vunpack.c.l.b16 %v48
    %v162 = vunpack.c.h.b16 %v48
    %v163 = vunpack.c.l.b16 %v49
    %v164 = vunpack.c.h.b16 %v49
    %v165 = vunpack.c.l.b16 %v50
    %v166 = vunpack.c.h.b16 %v50
    %v167 = vunpack.c.l.b16 %v51
    %v168 = vunpack.c.h.b16 %v51
    %v169 = vunpack.c.l.b16 %v52
    %v170 = vunpack.c.h.b16 %v52
    %v171 = vunpack.c.l.b16 %v53
    %v172 = vunpack.c.h.b16 %v53
    %v173 = vunpack.c.l.b16 %v54
    %v174 = vunpack.c.h.b16 %v54
    %v175 = vunpack.c.l.b16 %v55
    %v176 = vunpack.c.h.b16 %v55
    %v177 = vunpack.c.l.b16 %v56
    %v178 = vunpack.c.h.b16 %v56
    %v179 = vunpack.c.l.b16 %v57
    %v180 = vunpack.c.h.b16 %v57
    %v181 = vunpack.c.l.b16 %v58
    %v182 = vunpack.c.h.b16 %v58
    %v183 = vunpack.c.l.b16 %v59
    %v184 = vunpack.c.h.b16 %v59
    %v185 = vunpack.c.l.b16 %v60
    %v186 = vunpack.c.h.b16 %v60
    %v187 = vunpack.c.l.b16 %v61
    %v188 = vunpack.c.h.b16 %v61
    %v189 = vunpack.c.l.b16 %v62
    %v190 = vunpack.c.h.b16 %v62
    %v191 = vunpack.c.l.b16 %v63
    %v192 = vunpack.c.h.b16 %v63
    %v193 = vunpack.c.l.b16 %v64
    %v194 = vunpack.c.h.b16 %v64
    %v195 = vunpack.c.l.b16 %v65
    %v196 = vunpack.c.h.b16 %v65
    %v197 = vunpack.c.l.b16 %v66
    %v198 = vunpack.c.h.b16 %v66
    %v199 = vunpack.c.l.b16 %v67
    %v200 = vunpack.c.h.b16 %v67
    %v201 = vunpack.c.l.b16 %v68
    %v202 = vunpack.c.h.b16 %v68
    %v203 = vunpack.c.l.b16 %v69
    %v204 = vunpack.c.h.b16 %v69
    %v205 = vunpack.c.l.b16 %v70
    %v206 = vunpack.c.h.b16 %v70
    %v207 = vunpack.c.l.b16 %v71
    %v208 = vunpack.c.h.b16 %v71
    %v209 = vunpack.c.l.b16 %v72
    %v210 = vunpack.c.h.b16 %v72
    %v211 = vunpack.c.l.b16 %v73
    %v212 = vunpack.c.h.b16 %v73
    %v213 = vunpack.c.l.b16 %v74
    %v214 = vunpack.c.h.b16 %v74
    %v215 = vunpack.c.l.b16 %v75
    %v216 = vunpack.c.h.b16 %v75
    %v217 = vunpack.c.l.b16 %v76
    %v218 = vunpack.c.h.b16 %v76
    %v219 = vunpack.c.l.b16 %v77
    %v220 = vunpack.c.h.b16 %v77
    %v221 = vunpack.c.l.b16 %v78
    %v222 = vunpack.c.h.b16 %v78
    %v223 = vunpack.c.l.b16 %v79
    %v224 = vunpack.c.h.b16 %v79
    %v225 = vunpack.c.l.b16 %v80
    %v226 = vunpack.c.h.b16 %v80
    %v227 = vunpack.c.l.b16 %v81
    %v228 = vunpack.c.h.b16 %v81
    %v229 = vpack.c.b16 %v159, %v157
    %v230 = vpack.c.b16 %v160, %v158
    %v231 = vpack.c.b16 %v163, %v161
    %v232 = vpack.c.b16 %v164, %v162
    %v233 = vpack.c.b16 %v167, %v165
    %v234 = vpack.c.b16 %v168, %v166
    %v235 = vpack.c.b16 %v171, %v169
    %v236 = vpack.c.b16 %v172, %v170
    %v237 = vpack.c.b16 %v175, %v173
    %v238 = vpack.c.b16 %v176, %v174
    %v239 = vpack.c.b16 %v179, %v177
    %v240 = vpack.c.b16 %v180, %v178
    %v241 = vpack.c.b16 %v183, %v181
    %v242 = vpack.c.b16 %v184, %v182
    %v243 = vpack.c.b16 %v187, %v185
    %v244 = vpack.c.b16 %v188, %v186
    %v245 = vpack.c.b16 %v191, %v189
    %v246 = vpack.c.b16 %v192, %v190
    %v247 = vpack.c.b16 %v195, %v193
    %v248 = vpack.c.b16 %v196, %v194
    %v249 = vpack.c.b16 %v199, %v197
    %v250 = vpack.c.b16 %v200, %v198
    %v251 = vpack.c.b16 %v203, %v201
    %v252 = vpack.c.b16 %v204, %v202
    %v253 = vpack.c.b16 %v207, %v205
    %v254 = vpack.c.b16 %v208, %v206
    %v255 = vpack.c.b16 %v211, %v209
    %v256 = vpack.c.b16 %v212, %v210
    %v257 = vpack.c.b16 %v215, %v213
    %v258 = vpack.c.b16 %v216, %v214
    %v259 = vpack.c.b16 %v219, %v217
    %v260 = vpack.c.b16 %v220, %v218
    %v261 = vpack.c.b16 %v223, %v221
    %v262 = vpack.c.b16 %v224, %v222
    %v263 = vpack.c.b16 %v227, %v225
    %v264 = vpack.c.b16 %v228, %v226
    %v333 = vunpack.c.l.b16 %v82
    %v334 = vunpack.c.l.b16 %v83
    %v335 = vunpack.c.l.b16 %v84
    %v336 = vunpack.c.l.b16 %v85
    %v337 = vunpack.c.l.b16 %v86
    %v338 = vunpack.c.l.b16 %v87
    %v339 = vunpack.c.l.b16 %v88
    %v340 = vunpack.c.l.b16 %v89
    %v341 = vunpack.c.l.b16 %v90
    %v342 = vunpack.c.l.b16 %v91
    %v343 = vunpack.c.l.b16 %v92
    %v344 = vunpack.c.l.b16 %v93
    %v345 = vunpack.c.l.b16 %v94
    %v346 = vunpack.c.l.b16 %v95
    %v347 = vunpack.c.l.b16 %v96
    %v348 = vunpack.c.l.b16 %v97
    %v349 = vunpack.c.l.b16 %v98
    %v350 = vunpack.c.l.b16 %v99
    %v351 = vunpack.c.l.b16 %v100
    %v352 = vunpack.c.l.b16 %v101
    %v353 = vunpack.c.l.b16 %v102
    %v354 = vunpack.c.l.b16 %v103
    %v355 = vunpack.c.l.b16 %v104
    %v356 = vunpack.c.l.b16 %v105
    %v357 = vunpack.c.l.b16 %v106
    %v358 = vunpack.c.l.b16 %v107
    %v359 = vunpack.c.l.b16 %v108
    %v360 = vunpack.c.l.b16 %v109
    %v361 = vunpack.c.l.b16 %v110
    %v362 = vunpack.c.l.b16 %v111
    %v363 = vunpack.c.l.b16 %v112
    %v364 = vunpack.c.l.b16 %v113
    %v365 = vpack.c.b16 %v334, %v333
    %v366 = vpack.c.b16 %v336, %v335
    %v367 = vpack.c.b16 %v338, %v337
    %v368 = vpack.c.b16 %v340, %v339
    %v369 = vpack.c.b16 %v342, %v341
    %v370 = vpack.c.b16 %v344, %v343
    %v371 = vpack.c.b16 %v346, %v345
    %v372 = vpack.c.b16 %v348, %v347
    %v373 = vpack.c.b16 %v350, %v349
    %v374 = vpack.c.b16 %v352, %v351
    %v375 = vpack.c.b16 %v354, %v353
    %v376 = vpack.c.b16 %v356, %v355
    %v377 = vpack.c.b16 %v358, %v357
    %v378 = vpack.c.b16 %v360, %v359
    %v379 = vpack.c.b16 %v362, %v361
    %v380 = vpack.c.b16 %v364, %v363
    %397 = vmatprep.subr.bf16.mxu0 0
    %398 = vmatpush1.bf16.msra.mxu0 %v372
    %399 = vmatprep.subr.bf16.mxu0 0
    %400 = vmatpush1.bf16.msra.mxu0 %v371
    %401 = vmatprep.subr.bf16.mxu0 0
    %402 = vmatpush1.bf16.msra.mxu0 %v370
    %403 = vmatprep.subr.bf16.mxu0 0
    %404 = vmatpush1.bf16.msra.mxu0 %v369
    %405 = vmatprep.subr.bf16.mxu0 0
    %406 = vmatpush1.bf16.msra.mxu0 %v368
    %407 = vmatprep.subr.bf16.mxu0 0
    %408 = vmatpush1.bf16.msra.mxu0 %v367
    %409 = vmatprep.subr.bf16.mxu0 0
    %410 = vmatpush1.bf16.msra.mxu0 %v366
    %411 = vmatprep.subr.bf16.mxu0 0
    %412 = vmatpush1.bf16.msra.mxu0 %v365
    %413 = vmatprep.subr.bf16.mxu0 0
    %414 = vmatpush2.bf16.msra.mxu0 %v380
    %415 = vmatprep.subr.bf16.mxu0 0
    %416 = vmatpush2.bf16.msra.mxu0 %v379
    %417 = vmatprep.subr.bf16.mxu0 0
    %418 = vmatpush2.bf16.msra.mxu0 %v378
    %419 = vmatprep.subr.bf16.mxu0 0
    %420 = vmatpush2.bf16.msra.mxu0 %v377
    %421 = vmatprep.subr.bf16.mxu0 0
    %422 = vmatpush2.bf16.msra.mxu0 %v376
    %423 = vmatprep.subr.bf16.mxu0 0
    %424 = vmatpush2.bf16.msra.mxu0 %v375
    %425 = vmatprep.subr.bf16.mxu0 0
    %426 = vmatpush2.bf16.msra.mxu0 %v374
    %427 = vmatprep.subr.bf16.mxu0 0
    %428 = vmatpush2.bf16.msra.mxu0 %v373
    %429 = vmatprep.mubr.bf16.mxu0 %v230
    %430 = vmatmul.mubr.bf16.gmra.mxu0 %v229
    %v431 = vpop.f32.mrf.mxu0
    %v432 = vadd.f32 %v119, %v431
    %v433 = vpop.f32.mrf.mxu0
    %v434 = vpop.f32.mrf.mxu0
    %v435 = vadd.f32 %v119, %v434
    %v436 = vpop.f32.mrf.mxu0
    %437 = vmatprep.mubr.bf16.mxu0 %v232
    %438 = vmatmul.mubr.bf16.gmra.mxu0 %v231
    %v439 = vpop.f32.mrf.mxu0
    %v440 = vadd.f32 %v119, %v439
    %v441 = vpop.f32.mrf.mxu0
    %v442 = vpop.f32.mrf.mxu0
    %v443 = vadd.f32 %v119, %v442
    %v444 = vpop.f32.mrf.mxu0
    %445 = vmatprep.mubr.bf16.mxu0 %v234
    %446 = vmatmul.mubr.bf16.gmra.mxu0 %v233
    %v447 = vpop.f32.mrf.mxu0
    %v448 = vadd.f32 %v119, %v447
    %v449 = vpop.f32.mrf.mxu0
    %v450 = vpop.f32.mrf.mxu0
    %v451 = vadd.f32 %v119, %v450
    %v452 = vpop.f32.mrf.mxu0
    %453 = vmatprep.mubr.bf16.mxu0 %v236
    %454 = vmatmul.mubr.bf16.gmra.mxu0 %v235
    %v455 = vpop.f32.mrf.mxu0
    %v456 = vadd.f32 %v119, %v455
    %v457 = vpop.f32.mrf.mxu0
    %v458 = vpop.f32.mrf.mxu0
    %v459 = vadd.f32 %v119, %v458
    %v460 = vpop.f32.mrf.mxu0
    %461 = vmatprep.mubr.bf16.mxu0 %v238
    %462 = vmatmul.mubr.bf16.gmra.mxu0 %v237
    %v463 = vpop.f32.mrf.mxu0
    %v464 = vadd.f32 %v119, %v463
    %v465 = vpop.f32.mrf.mxu0
    %v466 = vpop.f32.mrf.mxu0
    %v467 = vadd.f32 %v119, %v466
    %v468 = vpop.f32.mrf.mxu0
    %469 = vmatprep.mubr.bf16.mxu0 %v240
    %470 = vmatmul.mubr.bf16.gmra.mxu0 %v239
    %v471 = vpop.f32.mrf.mxu0
    %v472 = vadd.f32 %v119, %v471
    %v473 = vpop.f32.mrf.mxu0
    %v474 = vpop.f32.mrf.mxu0
    %v475 = vadd.f32 %v119, %v474
    %v476 = vpop.f32.mrf.mxu0
    %477 = vmatprep.mubr.bf16.mxu0 %v242
    %478 = vmatmul.mubr.bf16.gmra.mxu0 %v241
    %v479 = vpop.f32.mrf.mxu0
    %v480 = vadd.f32 %v119, %v479
    %v481 = vpop.f32.mrf.mxu0
    %v482 = vpop.f32.mrf.mxu0
    %v483 = vadd.f32 %v119, %v482
    %v484 = vpop.f32.mrf.mxu0
    %485 = vmatprep.mubr.bf16.mxu0 %v244
    %486 = vmatmul.mubr.bf16.gmra.mxu0 %v243
    %v487 = vpop.f32.mrf.mxu0
    %v488 = vadd.f32 %v119, %v487
    %v489 = vpop.f32.mrf.mxu0
    %v490 = vpop.f32.mrf.mxu0
    %v491 = vadd.f32 %v119, %v490
    %v492 = vpop.f32.mrf.mxu0
    %493 = vmatprep.mubr.bf16.mxu0 %v246
    %494 = vmatmul.mubr.bf16.gmra.mxu0 %v245
    %v495 = vpop.f32.mrf.mxu0
    %v496 = vadd.f32 %v119, %v495
    %v497 = vpop.f32.mrf.mxu0
    %v498 = vpop.f32.mrf.mxu0
    %v499 = vadd.f32 %v119, %v498
    %v500 = vpop.f32.mrf.mxu0
    %501 = vmatprep.mubr.bf16.mxu0 %v248
    %502 = vmatmul.mubr.bf16.gmra.mxu0 %v247
    %v503 = vpop.f32.mrf.mxu0
    %v504 = vadd.f32 %v119, %v503
    %v505 = vpop.f32.mrf.mxu0
    %v506 = vpop.f32.mrf.mxu0
    %v507 = vadd.f32 %v119, %v506
    %v508 = vpop.f32.mrf.mxu0
    %509 = vmatprep.mubr.bf16.mxu0 %v250
    %510 = vmatmul.mubr.bf16.gmra.mxu0 %v249
    %v511 = vpop.f32.mrf.mxu0
    %v512 = vadd.f32 %v119, %v511
    %v513 = vpop.f32.mrf.mxu0
    %v514 = vpop.f32.mrf.mxu0
    %v515 = vadd.f32 %v119, %v514
    %v516 = vpop.f32.mrf.mxu0
    %517 = vmatprep.mubr.bf16.mxu0 %v252
    %518 = vmatmul.mubr.bf16.gmra.mxu0 %v251
    %v519 = vpop.f32.mrf.mxu0
    %v520 = vadd.f32 %v119, %v519
    %v521 = vpop.f32.mrf.mxu0
    %v522 = vpop.f32.mrf.mxu0
    %v523 = vadd.f32 %v119, %v522
    %v524 = vpop.f32.mrf.mxu0
    %525 = vmatprep.mubr.bf16.mxu0 %v254
    %526 = vmatmul.mubr.bf16.gmra.mxu0 %v253
    %v527 = vpop.f32.mrf.mxu0
    %v528 = vadd.f32 %v119, %v527
    %v529 = vpop.f32.mrf.mxu0
    %v530 = vpop.f32.mrf.mxu0
    %v531 = vadd.f32 %v119, %v530
    %v532 = vpop.f32.mrf.mxu0
    %533 = vmatprep.mubr.bf16.mxu0 %v256
    %534 = vmatmul.mubr.bf16.gmra.mxu0 %v255
    %v535 = vpop.f32.mrf.mxu0
    %v536 = vadd.f32 %v119, %v535
    %v537 = vpop.f32.mrf.mxu0
    %v538 = vpop.f32.mrf.mxu0
    %v539 = vadd.f32 %v119, %v538
    %v540 = vpop.f32.mrf.mxu0
    %541 = vmatprep.mubr.bf16.mxu0 %v258
    %542 = vmatmul.mubr.bf16.gmra.mxu0 %v257
    %v543 = vpop.f32.mrf.mxu0
    %v544 = vadd.f32 %v119, %v543
    %v545 = vpop.f32.mrf.mxu0
    %v546 = vpop.f32.mrf.mxu0
    %v547 = vadd.f32 %v119, %v546
    %v548 = vpop.f32.mrf.mxu0
    %549 = vmatprep.mubr.bf16.mxu0 %v260
    %550 = vmatmul.mubr.bf16.gmra.mxu0 %v259
    %v551 = vpop.f32.mrf.mxu0
    %v552 = vadd.f32 %v119, %v551
    %v553 = vpop.f32.mrf.mxu0
    %v554 = vpop.f32.mrf.mxu0
    %v555 = vadd.f32 %v119, %v554
    %v556 = vpop.f32.mrf.mxu0
    %557 = vmatprep.mubr.bf16.mxu0 %v262
    %558 = vmatmul.mubr.bf16.gmra.mxu0 %v261
    %v559 = vpop.f32.mrf.mxu0
    %v560 = vadd.f32 %v119, %v559
    %v561 = vpop.f32.mrf.mxu0
    %v562 = vpop.f32.mrf.mxu0
    %v563 = vadd.f32 %v119, %v562
    %v564 = vpop.f32.mrf.mxu0
    %565 = vmatprep.mubr.bf16.mxu0 %v264
    %566 = vmatmul.mubr.bf16.gmra.mxu0 %v263
    %v567 = vpop.f32.mrf.mxu0
    %v568 = vadd.f32 %v119, %v567
    %v569 = vpop.f32.mrf.mxu0
    %v570 = vpop.f32.mrf.mxu0
    %v571 = vadd.f32 %v119, %v570
    %v572 = vpop.f32.mrf.mxu0
    %573 = vdwg.mxu0
    %v574 = vmax.f32 %v432, 0.0
    %v575 = vmax.f32 %v435, 0.0
    %v576 = vmax.f32 %v440, 0.0
    %v577 = vmax.f32 %v443, 0.0
    %v578 = vmax.f32 %v448, 0.0
    %v579 = vmax.f32 %v451, 0.0
    %v580 = vmax.f32 %v456, 0.0
    %v581 = vmax.f32 %v459, 0.0
    %v582 = vmax.f32 %v464, 0.0
    %v583 = vmax.f32 %v467, 0.0
    %v584 = vmax.f32 %v472, 0.0
    %v585 = vmax.f32 %v475, 0.0
    %v586 = vmax.f32 %v480, 0.0
    %v587 = vmax.f32 %v483, 0.0
    %v588 = vmax.f32 %v488, 0.0
    %v589 = vmax.f32 %v491, 0.0
    %v590 = vmax.f32 %v496, 0.0
    %v591 = vmax.f32 %v499, 0.0
    %v592 = vmax.f32 %v504, 0.0
    %v593 = vmax.f32 %v507, 0.0
    %v594 = vmax.f32 %v512, 0.0
    %v595 = vmax.f32 %v515, 0.0
    %v596 = vmax.f32 %v520, 0.0
    %v597 = vmax.f32 %v523, 0.0
    %v598 = vmax.f32 %v528, 0.0
    %v599 = vmax.f32 %v531, 0.0
    %v600 = vmax.f32 %v536, 0.0
    %v601 = vmax.f32 %v539, 0.0
    %v602 = vmax.f32 %v544, 0.0
    %v603 = vmax.f32 %v547, 0.0
    %v604 = vmax.f32 %v552, 0.0
    %v605 = vmax.f32 %v555, 0.0
    %v606 = vmax.f32 %v560, 0.0
    %v607 = vmax.f32 %v563, 0.0
    %v608 = vmax.f32 %v568, 0.0
    %v609 = vmax.f32 %v571, 0.0
    %v610 = vpack.c.bf16 %v575, %v574
    %v611 = vpack.c.bf16 %v577, %v576
    %v612 = vpack.c.bf16 %v579, %v578
    %v613 = vpack.c.bf16 %v581, %v580
    %v614 = vpack.c.bf16 %v583, %v582
    %v615 = vpack.c.bf16 %v585, %v584
    %v616 = vpack.c.bf16 %v587, %v586
    %v617 = vpack.c.bf16 %v589, %v588
    %v618 = vpack.c.bf16 %v591, %v590
    %v619 = vpack.c.bf16 %v593, %v592
    %v620 = vpack.c.bf16 %v595, %v594
    %v621 = vpack.c.bf16 %v597, %v596
    %v622 = vpack.c.bf16 %v599, %v598
    %v623 = vpack.c.bf16 %v601, %v600
    %v624 = vpack.c.bf16 %v603, %v602
    %v625 = vpack.c.bf16 %v605, %v604
    %v626 = vpack.c.bf16 %v607, %v606
    %v627 = vpack.c.bf16 %v609, %v608
    %v628 = vld [vmem:[%s5] sm:$0x1]
    %v629 = vld [vmem:[%s4] sm:$0xf]
    %v630 = vld [vmem:[%s4 + $0x4] sm:$0xf]
    %v631 = vld [vmem:[%s4 + $0x8] sm:$0xf]
    %v632 = vld [vmem:[%s4 + $0xc] sm:$0xf]
    %v637 = vunpack.c.l.b16 %v629
    %v638 = vunpack.c.l.b16 %v630
    %v639 = vunpack.c.l.b16 %v631
    %v640 = vunpack.c.l.b16 %v632
    %v641 = vpack.c.b16 %v638, %v637
    %v642 = vpack.c.b16 %v640, %v639
    %vm645 = vcmask 261120
    %v647 = vsel %vm645, %v610, 0
    %v650 = vsel %vm645, %v611, 0
    %652 = vmatprep.subr.bf16.mxu0 0
    %653 = vmatpush1.bf16.msra.mxu0 0
    %654 = vmatprep.subr.bf16.mxu0 0
    %655 = vmatpush1.bf16.msra.mxu0 0
    %656 = vmatprep.subr.bf16.mxu0 0
    %657 = vmatpush1.bf16.msra.mxu0 0
    %658 = vmatprep.subr.bf16.mxu0 0
    %659 = vmatpush1.bf16.msra.mxu0 0
    %660 = vmatprep.subr.bf16.mxu0 0
    %661 = vmatpush1.bf16.msra.mxu0 0
    %662 = vmatprep.subr.bf16.mxu0 0
    %663 = vmatpush1.bf16.msra.mxu0 0
    %664 = vmatprep.subr.bf16.mxu0 0
    %665 = vmatpush1.bf16.msra.mxu0 %v642
    %666 = vmatprep.subr.bf16.mxu0 0
    %667 = vmatpush1.bf16.msra.mxu0 %v641
    %668 = vmatprep.subr.bf16.mxu0 0
    %669 = vmatpush2.bf16.msra.mxu0 0
    %670 = vmatprep.subr.bf16.mxu0 0
    %671 = vmatpush2.bf16.msra.mxu0 0
    %672 = vmatprep.subr.bf16.mxu0 0
    %673 = vmatpush2.bf16.msra.mxu0 0
    %674 = vmatprep.subr.bf16.mxu0 0
    %675 = vmatpush2.bf16.msra.mxu0 0
    %676 = vmatprep.subr.bf16.mxu0 0
    %677 = vmatpush2.bf16.msra.mxu0 0
    %678 = vmatprep.subr.bf16.mxu0 0
    %679 = vmatpush2.bf16.msra.mxu0 0
    %680 = vmatprep.subr.bf16.mxu0 0
    %681 = vmatpush2.bf16.msra.mxu0 0
    %682 = vmatprep.subr.bf16.mxu0 0
    %683 = vmatpush2.bf16.msra.mxu0 0
    %684 = vmatprep.mubr.bf16.mxu0 0
    %685 = vmatmul.mubr.bf16.gmra.mxu0 %v647
    %v686 = vpop.f32.mrf.mxu0
    %v687 = vadd.f32 0.0, %v686
    %v688 = vpop.f32.mrf.mxu0
    %v689 = vpop.f32.mrf.mxu0
    %v690 = vadd.f32 0.0, %v689
    %v691 = vpop.f32.mrf.mxu0
    %692 = vmatprep.mubr.bf16.mxu0 0
    %693 = vmatmul.mubr.bf16.gmra.mxu0 %v650
    %v694 = vpop.f32.mrf.mxu0
    %v695 = vadd.f32 0.0, %v694
    %v696 = vpop.f32.mrf.mxu0
    %v697 = vpop.f32.mrf.mxu0
    %v698 = vpop.f32.mrf.mxu0
    %699 = vdwg.mxu0
    %v701 = vlaneseq
    %v702 = vshrl.u32 %v701, 7
    %v703 = vsub.s32 0, %v702
    %v704 = vrot.slane %v628, %v703
    %v706 = vadd.f32 %v704, %v687
    %v707 = vadd.f32 %v704, %v690
    %v708 = vadd.f32 %v704, %v695
    %v709 = vld [vmem:[%s4 + $0x10] sm:$0xf]
    %v710 = vld [vmem:[%s4 + $0x14] sm:$0xf]
    %v711 = vld [vmem:[%s4 + $0x18] sm:$0xf]
    %v712 = vld [vmem:[%s4 + $0x1c] sm:$0xf]
    %vm715 = vcmask 1046528
    %v716 = vrot.slane %v611, 1
    %v717 = vrot.slane %v612, 1
    %v718 = vsel %vm715, %v716, %v717
    %v723 = vunpack.c.l.b16 %v709
    %v724 = vunpack.c.l.b16 %v710
    %v725 = vunpack.c.l.b16 %v711
    %v726 = vunpack.c.l.b16 %v712
    %v727 = vpack.c.b16 %v724, %v723
    %v728 = vpack.c.b16 %v726, %v725
    %v732 = vsel %vm645, %v718, 0
    %v735 = vsel %vm645, %v717, 0
    %737 = vmatprep.subr.bf16.mxu0 0
    %738 = vmatpush1.bf16.msra.mxu0 0
    %739 = vmatprep.subr.bf16.mxu0 0
    %740 = vmatpush1.bf16.msra.mxu0 0
    %741 = vmatprep.subr.bf16.mxu0 0
    %742 = vmatpush1.bf16.msra.mxu0 0
    %743 = vmatprep.subr.bf16.mxu0 0
    %744 = vmatpush1.bf16.msra.mxu0 0
    %745 = vmatprep.subr.bf16.mxu0 0
    %746 = vmatpush1.bf16.msra.mxu0 0
    %747 = vmatprep.subr.bf16.mxu0 0
    %748 = vmatpush1.bf16.msra.mxu0 0
    %749 = vmatprep.subr.bf16.mxu0 0
    %750 = vmatpush1.bf16.msra.mxu0 %v728
    %751 = vmatprep.subr.bf16.mxu0 0
    %752 = vmatpush1.bf16.msra.mxu0 %v727
    %753 = vmatprep.subr.bf16.mxu0 0
    %754 = vmatpush2.bf16.msra.mxu0 0
    %755 = vmatprep.subr.bf16.mxu0 0
    %756 = vmatpush2.bf16.msra.mxu0 0
    %757 = vmatprep.subr.bf16.mxu0 0
    %758 = vmatpush2.bf16.msra.mxu0 0
    %759 = vmatprep.subr.bf16.mxu0 0
    %760 = vmatpush2.bf16.msra.mxu0 0
    %761 = vmatprep.subr.bf16.mxu0 0
    %762 = vmatpush2.bf16.msra.mxu0 0
    %763 = vmatprep.subr.bf16.mxu0 0
    %764 = vmatpush2.bf16.msra.mxu0 0
    %765 = vmatprep.subr.bf16.mxu0 0
    %766 = vmatpush2.bf16.msra.mxu0 0
    %767 = vmatprep.subr.bf16.mxu0 0
    %768 = vmatpush2.bf16.msra.mxu0 0
    %769 = vmatprep.mubr.bf16.mxu0 0
    %770 = vmatmul.mubr.bf16.gmra.mxu0 %v732
    %v771 = vpop.f32.mrf.mxu0
    %v772 = vadd.f32 0.0, %v771
    %v773 = vpop.f32.mrf.mxu0
    %v774 = vpop.f32.mrf.mxu0
    %v775 = vadd.f32 0.0, %v774
    %v776 = vpop.f32.mrf.mxu0
    %777 = vmatprep.mubr.bf16.mxu0 0
    %778 = vmatmul.mubr.bf16.gmra.mxu0 %v735
    %v779 = vpop.f32.mrf.mxu0
    %v780 = vadd.f32 0.0, %v779
    %v781 = vpop.f32.mrf.mxu0
    %v782 = vpop.f32.mrf.mxu0
    %v783 = vpop.f32.mrf.mxu0
    %784 = vdwg.mxu0
    %v785 = vadd.f32 %v706, %v772
    %v786 = vadd.f32 %v707, %v775
    %v787 = vadd.f32 %v708, %v780
    %v788 = vld [vmem:[%s4 + $0x20] sm:$0xf]
    %v789 = vld [vmem:[%s4 + $0x24] sm:$0xf]
    %v790 = vld [vmem:[%s4 + $0x28] sm:$0xf]
    %v791 = vld [vmem:[%s4 + $0x2c] sm:$0xf]
    %vm793 = vcmask 1045504
    %v794 = vrot.slane %v612, 2
    %v795 = vrot.slane %v613, 2
    %v796 = vsel %vm793, %v794, %v795
    %v801 = vunpack.c.l.b16 %v788
    %v802 = vunpack.c.l.b16 %v789
    %v803 = vunpack.c.l.b16 %v790
    %v804 = vunpack.c.l.b16 %v791
    %v805 = vpack.c.b16 %v802, %v801
    %v806 = vpack.c.b16 %v804, %v803
    %v810 = vsel %vm645, %v796, 0
    %v813 = vsel %vm645, %v795, 0
    %815 = vmatprep.subr.bf16.mxu0 0
    %816 = vmatpush1.bf16.msra.mxu0 0
    %817 = vmatprep.subr.bf16.mxu0 0
    %818 = vmatpush1.bf16.msra.mxu0 0
    %819 = vmatprep.subr.bf16.mxu0 0
    %820 = vmatpush1.bf16.msra.mxu0 0
    %821 = vmatprep.subr.bf16.mxu0 0
    %822 = vmatpush1.bf16.msra.mxu0 0
    %823 = vmatprep.subr.bf16.mxu0 0
    %824 = vmatpush1.bf16.msra.mxu0 0
    %825 = vmatprep.subr.bf16.mxu0 0
    %826 = vmatpush1.bf16.msra.mxu0 0
    %827 = vmatprep.subr.bf16.mxu0 0
    %828 = vmatpush1.bf16.msra.mxu0 %v806
    %829 = vmatprep.subr.bf16.mxu0 0
    %830 = vmatpush1.bf16.msra.mxu0 %v805
    %831 = vmatprep.subr.bf16.mxu0 0
    %832 = vmatpush2.bf16.msra.mxu0 0
    %833 = vmatprep.subr.bf16.mxu0 0
    %834 = vmatpush2.bf16.msra.mxu0 0
    %835 = vmatprep.subr.bf16.mxu0 0
    %836 = vmatpush2.bf16.msra.mxu0 0
    %837 = vmatprep.subr.bf16.mxu0 0
    %838 = vmatpush2.bf16.msra.mxu0 0
    %839 = vmatprep.subr.bf16.mxu0 0
    %840 = vmatpush2.bf16.msra.mxu0 0
    %841 = vmatprep.subr.bf16.mxu0 0
    %842 = vmatpush2.bf16.msra.mxu0 0
    %843 = vmatprep.subr.bf16.mxu0 0
    %844 = vmatpush2.bf16.msra.mxu0 0
    %845 = vmatprep.subr.bf16.mxu0 0
    %846 = vmatpush2.bf16.msra.mxu0 0
    %847 = vmatprep.mubr.bf16.mxu0 0
    %848 = vmatmul.mubr.bf16.gmra.mxu0 %v810
    %v849 = vpop.f32.mrf.mxu0
    %v850 = vadd.f32 0.0, %v849
    %v851 = vpop.f32.mrf.mxu0
    %v852 = vpop.f32.mrf.mxu0
    %v853 = vadd.f32 0.0, %v852
    %v854 = vpop.f32.mrf.mxu0
    %855 = vmatprep.mubr.bf16.mxu0 0
    %856 = vmatmul.mubr.bf16.gmra.mxu0 %v813
    %v857 = vpop.f32.mrf.mxu0
    %v858 = vadd.f32 0.0, %v857
    %v859 = vpop.f32.mrf.mxu0
    %v860 = vpop.f32.mrf.mxu0
    %v861 = vpop.f32.mrf.mxu0
    %862 = vdwg.mxu0
    %v863 = vadd.f32 %v785, %v850
    %v864 = vadd.f32 %v786, %v853
    %v865 = vadd.f32 %v787, %v858
    %v866 = vld [vmem:[%s4 + $0x30] sm:$0xf]
    %v867 = vld [vmem:[%s4 + $0x34] sm:$0xf]
    %v868 = vld [vmem:[%s4 + $0x38] sm:$0xf]
    %v869 = vld [vmem:[%s4 + $0x3c] sm:$0xf]
    %vm871 = vcmask 1044480
    %v872 = vrot.slane %v613, 3
    %v873 = vrot.slane %v614, 3
    %v874 = vsel %vm871, %v872, %v873
    %v879 = vunpack.c.l.b16 %v866
    %v880 = vunpack.c.l.b16 %v867
    %v881 = vunpack.c.l.b16 %v868
    %v882 = vunpack.c.l.b16 %v869
    %v883 = vpack.c.b16 %v880, %v879
    %v884 = vpack.c.b16 %v882, %v881
    %v888 = vsel %vm645, %v874, 0
    %v891 = vsel %vm645, %v873, 0
    %893 = vmatprep.subr.bf16.mxu0 0
    %894 = vmatpush1.bf16.msra.mxu0 0
    %895 = vmatprep.subr.bf16.mxu0 0
    %896 = vmatpush1.bf16.msra.mxu0 0
    %897 = vmatprep.subr.bf16.mxu0 0
    %898 = vmatpush1.bf16.msra.mxu0 0
    %899 = vmatprep.subr.bf16.mxu0 0
    %900 = vmatpush1.bf16.msra.mxu0 0
    %901 = vmatprep.subr.bf16.mxu0 0
    %902 = vmatpush1.bf16.msra.mxu0 0
    %903 = vmatprep.subr.bf16.mxu0 0
    %904 = vmatpush1.bf16.msra.mxu0 0
    %905 = vmatprep.subr.bf16.mxu0 0
    %906 = vmatpush1.bf16.msra.mxu0 %v884
    %907 = vmatprep.subr.bf16.mxu0 0
    %908 = vmatpush1.bf16.msra.mxu0 %v883
    %909 = vmatprep.subr.bf16.mxu0 0
    %910 = vmatpush2.bf16.msra.mxu0 0
    %911 = vmatprep.subr.bf16.mxu0 0
    %912 = vmatpush2.bf16.msra.mxu0 0
    %913 = vmatprep.subr.bf16.mxu0 0
    %914 = vmatpush2.bf16.msra.mxu0 0
    %915 = vmatprep.subr.bf16.mxu0 0
    %916 = vmatpush2.bf16.msra.mxu0 0
    %917 = vmatprep.subr.bf16.mxu0 0
    %918 = vmatpush2.bf16.msra.mxu0 0
    %919 = vmatprep.subr.bf16.mxu0 0
    %920 = vmatpush2.bf16.msra.mxu0 0
    %921 = vmatprep.subr.bf16.mxu0 0
    %922 = vmatpush2.bf16.msra.mxu0 0
    %923 = vmatprep.subr.bf16.mxu0 0
    %924 = vmatpush2.bf16.msra.mxu0 0
    %925 = vmatprep.mubr.bf16.mxu0 0
    %926 = vmatmul.mubr.bf16.gmra.mxu0 %v888
    %v927 = vpop.f32.mrf.mxu0
    %v928 = vadd.f32 0.0, %v927
    %v929 = vpop.f32.mrf.mxu0
    %v930 = vpop.f32.mrf.mxu0
    %v931 = vadd.f32 0.0, %v930
    %v932 = vpop.f32.mrf.mxu0
    %933 = vmatprep.mubr.bf16.mxu0 0
    %934 = vmatmul.mubr.bf16.gmra.mxu0 %v891
    %v935 = vpop.f32.mrf.mxu0
    %v936 = vadd.f32 0.0, %v935
    %v937 = vpop.f32.mrf.mxu0
    %v938 = vpop.f32.mrf.mxu0
    %v939 = vpop.f32.mrf.mxu0
    %940 = vdwg.mxu0
    %v941 = vadd.f32 %v863, %v928
    %v942 = vadd.f32 %v864, %v931
    %v943 = vadd.f32 %v865, %v936
    %v944 = vld [vmem:[%s4 + $0x40] sm:$0xf]
    %v945 = vld [vmem:[%s4 + $0x44] sm:$0xf]
    %v946 = vld [vmem:[%s4 + $0x48] sm:$0xf]
    %v947 = vld [vmem:[%s4 + $0x4c] sm:$0xf]
    %vm949 = vcmask 1043456
    %v950 = vrot.slane %v614, 4
    %v951 = vrot.slane %v615, 4
    %v952 = vsel %vm949, %v950, %v951
    %v957 = vunpack.c.l.b16 %v944
    %v958 = vunpack.c.l.b16 %v945
    %v959 = vunpack.c.l.b16 %v946
    %v960 = vunpack.c.l.b16 %v947
    %v961 = vpack.c.b16 %v958, %v957
    %v962 = vpack.c.b16 %v960, %v959
    %v966 = vsel %vm645, %v952, 0
    %v969 = vsel %vm645, %v951, 0
    %971 = vmatprep.subr.bf16.mxu0 0
    %972 = vmatpush1.bf16.msra.mxu0 0
    %973 = vmatprep.subr.bf16.mxu0 0
    %974 = vmatpush1.bf16.msra.mxu0 0
    %975 = vmatprep.subr.bf16.mxu0 0
    %976 = vmatpush1.bf16.msra.mxu0 0
    %977 = vmatprep.subr.bf16.mxu0 0
    %978 = vmatpush1.bf16.msra.mxu0 0
    %979 = vmatprep.subr.bf16.mxu0 0
    %980 = vmatpush1.bf16.msra.mxu0 0
    %981 = vmatprep.subr.bf16.mxu0 0
    %982 = vmatpush1.bf16.msra.mxu0 0
    %983 = vmatprep.subr.bf16.mxu0 0
    %984 = vmatpush1.bf16.msra.mxu0 %v962
    %985 = vmatprep.subr.bf16.mxu0 0
    %986 = vmatpush1.bf16.msra.mxu0 %v961
    %987 = vmatprep.subr.bf16.mxu0 0
    %988 = vmatpush2.bf16.msra.mxu0 0
    %989 = vmatprep.subr.bf16.mxu0 0
    %990 = vmatpush2.bf16.msra.mxu0 0
    %991 = vmatprep.subr.bf16.mxu0 0
    %992 = vmatpush2.bf16.msra.mxu0 0
    %993 = vmatprep.subr.bf16.mxu0 0
    %994 = vmatpush2.bf16.msra.mxu0 0
    %995 = vmatprep.subr.bf16.mxu0 0
    %996 = vmatpush2.bf16.msra.mxu0 0
    %997 = vmatprep.subr.bf16.mxu0 0
    %998 = vmatpush2.bf16.msra.mxu0 0
    %999 = vmatprep.subr.bf16.mxu0 0
    %1000 = vmatpush2.bf16.msra.mxu0 0
    %1001 = vmatprep.subr.bf16.mxu0 0
    %1002 = vmatpush2.bf16.msra.mxu0 0
    %1003 = vmatprep.mubr.bf16.mxu0 0
    %1004 = vmatmul.mubr.bf16.gmra.mxu0 %v966
    %v1005 = vpop.f32.mrf.mxu0
    %v1006 = vadd.f32 0.0, %v1005
    %v1007 = vpop.f32.mrf.mxu0
    %v1008 = vpop.f32.mrf.mxu0
    %v1009 = vadd.f32 0.0, %v1008
    %v1010 = vpop.f32.mrf.mxu0
    %1011 = vmatprep.mubr.bf16.mxu0 0
    %1012 = vmatmul.mubr.bf16.gmra.mxu0 %v969
    %v1013 = vpop.f32.mrf.mxu0
    %v1014 = vadd.f32 0.0, %v1013
    %v1015 = vpop.f32.mrf.mxu0
    %v1016 = vpop.f32.mrf.mxu0
    %v1017 = vpop.f32.mrf.mxu0
    %1018 = vdwg.mxu0
    %v1019 = vadd.f32 %v941, %v1006
    %v1020 = vadd.f32 %v942, %v1009
    %v1021 = vadd.f32 %v943, %v1014
    %v1022 = vld [vmem:[%s4 + $0x50] sm:$0xf]
    %v1023 = vld [vmem:[%s4 + $0x54] sm:$0xf]
    %v1024 = vld [vmem:[%s4 + $0x58] sm:$0xf]
    %v1025 = vld [vmem:[%s4 + $0x5c] sm:$0xf]
    %vm1027 = vcmask 1042432
    %v1028 = vrot.slane %v615, 5
    %v1029 = vrot.slane %v616, 5
    %v1030 = vsel %vm1027, %v1028, %v1029
    %v1035 = vunpack.c.l.b16 %v1022
    %v1036 = vunpack.c.l.b16 %v1023
    %v1037 = vunpack.c.l.b16 %v1024
    %v1038 = vunpack.c.l.b16 %v1025
    %v1039 = vpack.c.b16 %v1036, %v1035
    %v1040 = vpack.c.b16 %v1038, %v1037
    %v1044 = vsel %vm645, %v1030, 0
    %v1047 = vsel %vm645, %v1029, 0
    %1049 = vmatprep.subr.bf16.mxu0 0
    %1050 = vmatpush1.bf16.msra.mxu0 0
    %1051 = vmatprep.subr.bf16.mxu0 0
    %1052 = vmatpush1.bf16.msra.mxu0 0
    %1053 = vmatprep.subr.bf16.mxu0 0
    %1054 = vmatpush1.bf16.msra.mxu0 0
    %1055 = vmatprep.subr.bf16.mxu0 0
    %1056 = vmatpush1.bf16.msra.mxu0 0
    %1057 = vmatprep.subr.bf16.mxu0 0
    %1058 = vmatpush1.bf16.msra.mxu0 0
    %1059 = vmatprep.subr.bf16.mxu0 0
    %1060 = vmatpush1.bf16.msra.mxu0 0
    %1061 = vmatprep.subr.bf16.mxu0 0
    %1062 = vmatpush1.bf16.msra.mxu0 %v1040
    %1063 = vmatprep.subr.bf16.mxu0 0
    %1064 = vmatpush1.bf16.msra.mxu0 %v1039
    %1065 = vmatprep.subr.bf16.mxu0 0
    %1066 = vmatpush2.bf16.msra.mxu0 0
    %1067 = vmatprep.subr.bf16.mxu0 0
    %1068 = vmatpush2.bf16.msra.mxu0 0
    %1069 = vmatprep.subr.bf16.mxu0 0
    %1070 = vmatpush2.bf16.msra.mxu0 0
    %1071 = vmatprep.subr.bf16.mxu0 0
    %1072 = vmatpush2.bf16.msra.mxu0 0
    %1073 = vmatprep.subr.bf16.mxu0 0
    %1074 = vmatpush2.bf16.msra.mxu0 0
    %1075 = vmatprep.subr.bf16.mxu0 0
    %1076 = vmatpush2.bf16.msra.mxu0 0
    %1077 = vmatprep.subr.bf16.mxu0 0
    %1078 = vmatpush2.bf16.msra.mxu0 0
    %1079 = vmatprep.subr.bf16.mxu0 0
    %1080 = vmatpush2.bf16.msra.mxu0 0
    %1081 = vmatprep.mubr.bf16.mxu0 0
    %1082 = vmatmul.mubr.bf16.gmra.mxu0 %v1044
    %v1083 = vpop.f32.mrf.mxu0
    %v1084 = vadd.f32 0.0, %v1083
    %v1085 = vpop.f32.mrf.mxu0
    %v1086 = vpop.f32.mrf.mxu0
    %v1087 = vadd.f32 0.0, %v1086
    %v1088 = vpop.f32.mrf.mxu0
    %1089 = vmatprep.mubr.bf16.mxu0 0
    %1090 = vmatmul.mubr.bf16.gmra.mxu0 %v1047
    %v1091 = vpop.f32.mrf.mxu0
    %v1092 = vadd.f32 0.0, %v1091
    %v1093 = vpop.f32.mrf.mxu0
    %v1094 = vpop.f32.mrf.mxu0
    %v1095 = vpop.f32.mrf.mxu0
    %1096 = vdwg.mxu0
    %v1097 = vadd.f32 %v1019, %v1084
    %v1098 = vadd.f32 %v1020, %v1087
    %v1099 = vadd.f32 %v1021, %v1092
    %v1100 = vld [vmem:[%s4 + $0x60] sm:$0xf]
    %v1101 = vld [vmem:[%s4 + $0x64] sm:$0xf]
    %v1102 = vld [vmem:[%s4 + $0x68] sm:$0xf]
    %v1103 = vld [vmem:[%s4 + $0x6c] sm:$0xf]
    %vm1105 = vcmask 1041408
    %v1106 = vrot.slane %v616, 6
    %v1107 = vrot.slane %v617, 6
    %v1108 = vsel %vm1105, %v1106, %v1107
    %v1113 = vunpack.c.l.b16 %v1100
    %v1114 = vunpack.c.l.b16 %v1101
    %v1115 = vunpack.c.l.b16 %v1102
    %v1116 = vunpack.c.l.b16 %v1103
    %v1117 = vpack.c.b16 %v1114, %v1113
    %v1118 = vpack.c.b16 %v1116, %v1115
    %v1122 = vsel %vm645, %v1108, 0
    %v1125 = vsel %vm645, %v1107, 0
    %1127 = vmatprep.subr.bf16.mxu0 0
    %1128 = vmatpush1.bf16.msra.mxu0 0
    %1129 = vmatprep.subr.bf16.mxu0 0
    %1130 = vmatpush1.bf16.msra.mxu0 0
    %1131 = vmatprep.subr.bf16.mxu0 0
    %1132 = vmatpush1.bf16.msra.mxu0 0
    %1133 = vmatprep.subr.bf16.mxu0 0
    %1134 = vmatpush1.bf16.msra.mxu0 0
    %1135 = vmatprep.subr.bf16.mxu0 0
    %1136 = vmatpush1.bf16.msra.mxu0 0
    %1137 = vmatprep.subr.bf16.mxu0 0
    %1138 = vmatpush1.bf16.msra.mxu0 0
    %1139 = vmatprep.subr.bf16.mxu0 0
    %1140 = vmatpush1.bf16.msra.mxu0 %v1118
    %1141 = vmatprep.subr.bf16.mxu0 0
    %1142 = vmatpush1.bf16.msra.mxu0 %v1117
    %1143 = vmatprep.subr.bf16.mxu0 0
    %1144 = vmatpush2.bf16.msra.mxu0 0
    %1145 = vmatprep.subr.bf16.mxu0 0
    %1146 = vmatpush2.bf16.msra.mxu0 0
    %1147 = vmatprep.subr.bf16.mxu0 0
    %1148 = vmatpush2.bf16.msra.mxu0 0
    %1149 = vmatprep.subr.bf16.mxu0 0
    %1150 = vmatpush2.bf16.msra.mxu0 0
    %1151 = vmatprep.subr.bf16.mxu0 0
    %1152 = vmatpush2.bf16.msra.mxu0 0
    %1153 = vmatprep.subr.bf16.mxu0 0
    %1154 = vmatpush2.bf16.msra.mxu0 0
    %1155 = vmatprep.subr.bf16.mxu0 0
    %1156 = vmatpush2.bf16.msra.mxu0 0
    %1157 = vmatprep.subr.bf16.mxu0 0
    %1158 = vmatpush2.bf16.msra.mxu0 0
    %1159 = vmatprep.mubr.bf16.mxu0 0
    %1160 = vmatmul.mubr.bf16.gmra.mxu0 %v1122
    %v1161 = vpop.f32.mrf.mxu0
    %v1162 = vadd.f32 0.0, %v1161
    %v1163 = vpop.f32.mrf.mxu0
    %v1164 = vpop.f32.mrf.mxu0
    %v1165 = vadd.f32 0.0, %v1164
    %v1166 = vpop.f32.mrf.mxu0
    %1167 = vmatprep.mubr.bf16.mxu0 0
    %1168 = vmatmul.mubr.bf16.gmra.mxu0 %v1125
    %v1169 = vpop.f32.mrf.mxu0
    %v1170 = vadd.f32 0.0, %v1169
    %v1171 = vpop.f32.mrf.mxu0
    %v1172 = vpop.f32.mrf.mxu0
    %v1173 = vpop.f32.mrf.mxu0
    %1174 = vdwg.mxu0
    %v1175 = vadd.f32 %v1097, %v1162
    %v1176 = vadd.f32 %v1098, %v1165
    %v1177 = vadd.f32 %v1099, %v1170
    %v1178 = vld [vmem:[%s4 + $0x70] sm:$0xf]
    %v1179 = vld [vmem:[%s4 + $0x74] sm:$0xf]
    %v1180 = vld [vmem:[%s4 + $0x78] sm:$0xf]
    %v1181 = vld [vmem:[%s4 + $0x7c] sm:$0xf]
    %vm1183 = vcmask 1040384
    %v1184 = vrot.slane %v617, 7
    %v1185 = vrot.slane %v618, 7
    %v1186 = vsel %vm1183, %v1184, %v1185
    %v1191 = vunpack.c.l.b16 %v1178
    %v1192 = vunpack.c.l.b16 %v1179
    %v1193 = vunpack.c.l.b16 %v1180
    %v1194 = vunpack.c.l.b16 %v1181
    %v1195 = vpack.c.b16 %v1192, %v1191
    %v1196 = vpack.c.b16 %v1194, %v1193
    %v1200 = vsel %vm645, %v1186, 0
    %v1203 = vsel %vm645, %v1185, 0
    %1205 = vmatprep.subr.bf16.mxu0 0
    %1206 = vmatpush1.bf16.msra.mxu0 0
    %1207 = vmatprep.subr.bf16.mxu0 0
    %1208 = vmatpush1.bf16.msra.mxu0 0
    %1209 = vmatprep.subr.bf16.mxu0 0
    %1210 = vmatpush1.bf16.msra.mxu0 0
    %1211 = vmatprep.subr.bf16.mxu0 0
    %1212 = vmatpush1.bf16.msra.mxu0 0
    %1213 = vmatprep.subr.bf16.mxu0 0
    %1214 = vmatpush1.bf16.msra.mxu0 0
    %1215 = vmatprep.subr.bf16.mxu0 0
    %1216 = vmatpush1.bf16.msra.mxu0 0
    %1217 = vmatprep.subr.bf16.mxu0 0
    %1218 = vmatpush1.bf16.msra.mxu0 %v1196
    %1219 = vmatprep.subr.bf16.mxu0 0
    %1220 = vmatpush1.bf16.msra.mxu0 %v1195
    %1221 = vmatprep.subr.bf16.mxu0 0
    %1222 = vmatpush2.bf16.msra.mxu0 0
    %1223 = vmatprep.subr.bf16.mxu0 0
    %1224 = vmatpush2.bf16.msra.mxu0 0
    %1225 = vmatprep.subr.bf16.mxu0 0
    %1226 = vmatpush2.bf16.msra.mxu0 0
    %1227 = vmatprep.subr.bf16.mxu0 0
    %1228 = vmatpush2.bf16.msra.mxu0 0
    %1229 = vmatprep.subr.bf16.mxu0 0
    %1230 = vmatpush2.bf16.msra.mxu0 0
    %1231 = vmatprep.subr.bf16.mxu0 0
    %1232 = vmatpush2.bf16.msra.mxu0 0
    %1233 = vmatprep.subr.bf16.mxu0 0
    %1234 = vmatpush2.bf16.msra.mxu0 0
    %1235 = vmatprep.subr.bf16.mxu0 0
    %1236 = vmatpush2.bf16.msra.mxu0 0
    %1237 = vmatprep.mubr.bf16.mxu0 0
    %1238 = vmatmul.mubr.bf16.gmra.mxu0 %v1200
    %v1239 = vpop.f32.mrf.mxu0
    %v1240 = vadd.f32 0.0, %v1239
    %v1241 = vpop.f32.mrf.mxu0
    %v1242 = vpop.f32.mrf.mxu0
    %v1243 = vadd.f32 0.0, %v1242
    %v1244 = vpop.f32.mrf.mxu0
    %1245 = vmatprep.mubr.bf16.mxu0 0
    %1246 = vmatmul.mubr.bf16.gmra.mxu0 %v1203
    %v1247 = vpop.f32.mrf.mxu0
    %v1248 = vadd.f32 0.0, %v1247
    %v1249 = vpop.f32.mrf.mxu0
    %v1250 = vpop.f32.mrf.mxu0
    %v1251 = vpop.f32.mrf.mxu0
    %1252 = vdwg.mxu0
    %v1253 = vadd.f32 %v1175, %v1240
    %v1254 = vadd.f32 %v1176, %v1243
    %v1255 = vadd.f32 %v1177, %v1248
    %v1256 = vld [vmem:[%s4 + $0x80] sm:$0xf]
    %v1257 = vld [vmem:[%s4 + $0x84] sm:$0xf]
    %v1258 = vld [vmem:[%s4 + $0x88] sm:$0xf]
    %v1259 = vld [vmem:[%s4 + $0x8c] sm:$0xf]
    %v1264 = vunpack.c.l.b16 %v1256
    %v1265 = vunpack.c.l.b16 %v1257
    %v1266 = vunpack.c.l.b16 %v1258
    %v1267 = vunpack.c.l.b16 %v1259
    %v1268 = vpack.c.b16 %v1265, %v1264
    %v1269 = vpack.c.b16 %v1267, %v1266
    %v1273 = vsel %vm645, %v619, 0
    %v1276 = vsel %vm645, %v620, 0
    %1278 = vmatprep.subr.bf16.mxu0 0
    %1279 = vmatpush1.bf16.msra.mxu0 0
    %1280 = vmatprep.subr.bf16.mxu0 0
    %1281 = vmatpush1.bf16.msra.mxu0 0
    %1282 = vmatprep.subr.bf16.mxu0 0
    %1283 = vmatpush1.bf16.msra.mxu0 0
    %1284 = vmatprep.subr.bf16.mxu0 0
    %1285 = vmatpush1.bf16.msra.mxu0 0
    %1286 = vmatprep.subr.bf16.mxu0 0
    %1287 = vmatpush1.bf16.msra.mxu0 0
    %1288 = vmatprep.subr.bf16.mxu0 0
    %1289 = vmatpush1.bf16.msra.mxu0 0
    %1290 = vmatprep.subr.bf16.mxu0 0
    %1291 = vmatpush1.bf16.msra.mxu0 %v1269
    %1292 = vmatprep.subr.bf16.mxu0 0
    %1293 = vmatpush1.bf16.msra.mxu0 %v1268
    %1294 = vmatprep.subr.bf16.mxu0 0
    %1295 = vmatpush2.bf16.msra.mxu0 0
    %1296 = vmatprep.subr.bf16.mxu0 0
    %1297 = vmatpush2.bf16.msra.mxu0 0
    %1298 = vmatprep.subr.bf16.mxu0 0
    %1299 = vmatpush2.bf16.msra.mxu0 0
    %1300 = vmatprep.subr.bf16.mxu0 0
    %1301 = vmatpush2.bf16.msra.mxu0 0
    %1302 = vmatprep.subr.bf16.mxu0 0
    %1303 = vmatpush2.bf16.msra.mxu0 0
    %1304 = vmatprep.subr.bf16.mxu0 0
    %1305 = vmatpush2.bf16.msra.mxu0 0
    %1306 = vmatprep.subr.bf16.mxu0 0
    %1307 = vmatpush2.bf16.msra.mxu0 0
    %1308 = vmatprep.subr.bf16.mxu0 0
    %1309 = vmatpush2.bf16.msra.mxu0 0
    %1310 = vmatprep.mubr.bf16.mxu0 0
    %1311 = vmatmul.mubr.bf16.gmra.mxu0 %v1273
    %v1312 = vpop.f32.mrf.mxu0
    %v1313 = vadd.f32 0.0, %v1312
    %v1314 = vpop.f32.mrf.mxu0
    %v1315 = vpop.f32.mrf.mxu0
    %v1316 = vadd.f32 0.0, %v1315
    %v1317 = vpop.f32.mrf.mxu0
    %1318 = vmatprep.mubr.bf16.mxu0 0
    %1319 = vmatmul.mubr.bf16.gmra.mxu0 %v1276
    %v1320 = vpop.f32.mrf.mxu0
    %v1321 = vadd.f32 0.0, %v1320
    %v1322 = vpop.f32.mrf.mxu0
    %v1323 = vpop.f32.mrf.mxu0
    %v1324 = vpop.f32.mrf.mxu0
    %1325 = vdwg.mxu0
    %v1326 = vadd.f32 %v1253, %v1313
    %v1327 = vadd.f32 %v1254, %v1316
    %v1328 = vadd.f32 %v1255, %v1321
    %v1329 = vld [vmem:[%s4 + $0x90] sm:$0xf]
    %v1330 = vld [vmem:[%s4 + $0x94] sm:$0xf]
    %v1331 = vld [vmem:[%s4 + $0x98] sm:$0xf]
    %v1332 = vld [vmem:[%s4 + $0x9c] sm:$0xf]
    %v1335 = vrot.slane %v620, 1
    %v1336 = vrot.slane %v621, 1
    %v1337 = vsel %vm715, %v1335, %v1336
    %v1342 = vunpack.c.l.b16 %v1329
    %v1343 = vunpack.c.l.b16 %v1330
    %v1344 = vunpack.c.l.b16 %v1331
    %v1345 = vunpack.c.l.b16 %v1332
    %v1346 = vpack.c.b16 %v1343, %v1342
    %v1347 = vpack.c.b16 %v1345, %v1344
    %v1351 = vsel %vm645, %v1337, 0
    %v1354 = vsel %vm645, %v1336, 0
    %1356 = vmatprep.subr.bf16.mxu0 0
    %1357 = vmatpush1.bf16.msra.mxu0 0
    %1358 = vmatprep.subr.bf16.mxu0 0
    %1359 = vmatpush1.bf16.msra.mxu0 0
    %1360 = vmatprep.subr.bf16.mxu0 0
    %1361 = vmatpush1.bf16.msra.mxu0 0
    %1362 = vmatprep.subr.bf16.mxu0 0
    %1363 = vmatpush1.bf16.msra.mxu0 0
    %1364 = vmatprep.subr.bf16.mxu0 0
    %1365 = vmatpush1.bf16.msra.mxu0 0
    %1366 = vmatprep.subr.bf16.mxu0 0
    %1367 = vmatpush1.bf16.msra.mxu0 0
    %1368 = vmatprep.subr.bf16.mxu0 0
    %1369 = vmatpush1.bf16.msra.mxu0 %v1347
    %1370 = vmatprep.subr.bf16.mxu0 0
    %1371 = vmatpush1.bf16.msra.mxu0 %v1346
    %1372 = vmatprep.subr.bf16.mxu0 0
    %1373 = vmatpush2.bf16.msra.mxu0 0
    %1374 = vmatprep.subr.bf16.mxu0 0
    %1375 = vmatpush2.bf16.msra.mxu0 0
    %1376 = vmatprep.subr.bf16.mxu0 0
    %1377 = vmatpush2.bf16.msra.mxu0 0
    %1378 = vmatprep.subr.bf16.mxu0 0
    %1379 = vmatpush2.bf16.msra.mxu0 0
    %1380 = vmatprep.subr.bf16.mxu0 0
    %1381 = vmatpush2.bf16.msra.mxu0 0
    %1382 = vmatprep.subr.bf16.mxu0 0
    %1383 = vmatpush2.bf16.msra.mxu0 0
    %1384 = vmatprep.subr.bf16.mxu0 0
    %1385 = vmatpush2.bf16.msra.mxu0 0
    %1386 = vmatprep.subr.bf16.mxu0 0
    %1387 = vmatpush2.bf16.msra.mxu0 0
    %1388 = vmatprep.mubr.bf16.mxu0 0
    %1389 = vmatmul.mubr.bf16.gmra.mxu0 %v1351
    %v1390 = vpop.f32.mrf.mxu0
    %v1391 = vadd.f32 0.0, %v1390
    %v1392 = vpop.f32.mrf.mxu0
    %v1393 = vpop.f32.mrf.mxu0
    %v1394 = vadd.f32 0.0, %v1393
    %v1395 = vpop.f32.mrf.mxu0
    %1396 = vmatprep.mubr.bf16.mxu0 0
    %1397 = vmatmul.mubr.bf16.gmra.mxu0 %v1354
    %v1398 = vpop.f32.mrf.mxu0
    %v1399 = vadd.f32 0.0, %v1398
    %v1400 = vpop.f32.mrf.mxu0
    %v1401 = vpop.f32.mrf.mxu0
    %v1402 = vpop.f32.mrf.mxu0
    %1403 = vdwg.mxu0
    %v1404 = vadd.f32 %v1326, %v1391
    %v1405 = vadd.f32 %v1327, %v1394
    %v1406 = vadd.f32 %v1328, %v1399
    %v1407 = vld [vmem:[%s4 + $0xa0] sm:$0xf]
    %v1408 = vld [vmem:[%s4 + $0xa4] sm:$0xf]
    %v1409 = vld [vmem:[%s4 + $0xa8] sm:$0xf]
    %v1410 = vld [vmem:[%s4 + $0xac] sm:$0xf]
    %v1412 = vrot.slane %v621, 2
    %v1413 = vrot.slane %v622, 2
    %v1414 = vsel %vm793, %v1412, %v1413
    %v1419 = vunpack.c.l.b16 %v1407
    %v1420 = vunpack.c.l.b16 %v1408
    %v1421 = vunpack.c.l.b16 %v1409
    %v1422 = vunpack.c.l.b16 %v1410
    %v1423 = vpack.c.b16 %v1420, %v1419
    %v1424 = vpack.c.b16 %v1422, %v1421
    %v1428 = vsel %vm645, %v1414, 0
    %v1431 = vsel %vm645, %v1413, 0
    %1433 = vmatprep.subr.bf16.mxu0 0
    %1434 = vmatpush1.bf16.msra.mxu0 0
    %1435 = vmatprep.subr.bf16.mxu0 0
    %1436 = vmatpush1.bf16.msra.mxu0 0
    %1437 = vmatprep.subr.bf16.mxu0 0
    %1438 = vmatpush1.bf16.msra.mxu0 0
    %1439 = vmatprep.subr.bf16.mxu0 0
    %1440 = vmatpush1.bf16.msra.mxu0 0
    %1441 = vmatprep.subr.bf16.mxu0 0
    %1442 = vmatpush1.bf16.msra.mxu0 0
    %1443 = vmatprep.subr.bf16.mxu0 0
    %1444 = vmatpush1.bf16.msra.mxu0 0
    %1445 = vmatprep.subr.bf16.mxu0 0
    %1446 = vmatpush1.bf16.msra.mxu0 %v1424
    %1447 = vmatprep.subr.bf16.mxu0 0
    %1448 = vmatpush1.bf16.msra.mxu0 %v1423
    %1449 = vmatprep.subr.bf16.mxu0 0
    %1450 = vmatpush2.bf16.msra.mxu0 0
    %1451 = vmatprep.subr.bf16.mxu0 0
    %1452 = vmatpush2.bf16.msra.mxu0 0
    %1453 = vmatprep.subr.bf16.mxu0 0
    %1454 = vmatpush2.bf16.msra.mxu0 0
    %1455 = vmatprep.subr.bf16.mxu0 0
    %1456 = vmatpush2.bf16.msra.mxu0 0
    %1457 = vmatprep.subr.bf16.mxu0 0
    %1458 = vmatpush2.bf16.msra.mxu0 0
    %1459 = vmatprep.subr.bf16.mxu0 0
    %1460 = vmatpush2.bf16.msra.mxu0 0
    %1461 = vmatprep.subr.bf16.mxu0 0
    %1462 = vmatpush2.bf16.msra.mxu0 0
    %1463 = vmatprep.subr.bf16.mxu0 0
    %1464 = vmatpush2.bf16.msra.mxu0 0
    %1465 = vmatprep.mubr.bf16.mxu0 0
    %1466 = vmatmul.mubr.bf16.gmra.mxu0 %v1428
    %v1467 = vpop.f32.mrf.mxu0
    %v1468 = vadd.f32 0.0, %v1467
    %v1469 = vpop.f32.mrf.mxu0
    %v1470 = vpop.f32.mrf.mxu0
    %v1471 = vadd.f32 0.0, %v1470
    %v1472 = vpop.f32.mrf.mxu0
    %1473 = vmatprep.mubr.bf16.mxu0 0
    %1474 = vmatmul.mubr.bf16.gmra.mxu0 %v1431
    %v1475 = vpop.f32.mrf.mxu0
    %v1476 = vadd.f32 0.0, %v1475
    %v1477 = vpop.f32.mrf.mxu0
    %v1478 = vpop.f32.mrf.mxu0
    %v1479 = vpop.f32.mrf.mxu0
    %1480 = vdwg.mxu0
    %v1481 = vadd.f32 %v1404, %v1468
    %v1482 = vadd.f32 %v1405, %v1471
    %v1483 = vadd.f32 %v1406, %v1476
    %v1484 = vld [vmem:[%s4 + $0xb0] sm:$0xf]
    %v1485 = vld [vmem:[%s4 + $0xb4] sm:$0xf]
    %v1486 = vld [vmem:[%s4 + $0xb8] sm:$0xf]
    %v1487 = vld [vmem:[%s4 + $0xbc] sm:$0xf]
    %v1489 = vrot.slane %v622, 3
    %v1490 = vrot.slane %v623, 3
    %v1491 = vsel %vm871, %v1489, %v1490
    %v1496 = vunpack.c.l.b16 %v1484
    %v1497 = vunpack.c.l.b16 %v1485
    %v1498 = vunpack.c.l.b16 %v1486
    %v1499 = vunpack.c.l.b16 %v1487
    %v1500 = vpack.c.b16 %v1497, %v1496
    %v1501 = vpack.c.b16 %v1499, %v1498
    %v1505 = vsel %vm645, %v1491, 0
    %v1508 = vsel %vm645, %v1490, 0
    %1510 = vmatprep.subr.bf16.mxu0 0
    %1511 = vmatpush1.bf16.msra.mxu0 0
    %1512 = vmatprep.subr.bf16.mxu0 0
    %1513 = vmatpush1.bf16.msra.mxu0 0
    %1514 = vmatprep.subr.bf16.mxu0 0
    %1515 = vmatpush1.bf16.msra.mxu0 0
    %1516 = vmatprep.subr.bf16.mxu0 0
    %1517 = vmatpush1.bf16.msra.mxu0 0
    %1518 = vmatprep.subr.bf16.mxu0 0
    %1519 = vmatpush1.bf16.msra.mxu0 0
    %1520 = vmatprep.subr.bf16.mxu0 0
    %1521 = vmatpush1.bf16.msra.mxu0 0
    %1522 = vmatprep.subr.bf16.mxu0 0
    %1523 = vmatpush1.bf16.msra.mxu0 %v1501
    %1524 = vmatprep.subr.bf16.mxu0 0
    %1525 = vmatpush1.bf16.msra.mxu0 %v1500
    %1526 = vmatprep.subr.bf16.mxu0 0
    %1527 = vmatpush2.bf16.msra.mxu0 0
    %1528 = vmatprep.subr.bf16.mxu0 0
    %1529 = vmatpush2.bf16.msra.mxu0 0
    %1530 = vmatprep.subr.bf16.mxu0 0
    %1531 = vmatpush2.bf16.msra.mxu0 0
    %1532 = vmatprep.subr.bf16.mxu0 0
    %1533 = vmatpush2.bf16.msra.mxu0 0
    %1534 = vmatprep.subr.bf16.mxu0 0
    %1535 = vmatpush2.bf16.msra.mxu0 0
    %1536 = vmatprep.subr.bf16.mxu0 0
    %1537 = vmatpush2.bf16.msra.mxu0 0
    %1538 = vmatprep.subr.bf16.mxu0 0
    %1539 = vmatpush2.bf16.msra.mxu0 0
    %1540 = vmatprep.subr.bf16.mxu0 0
    %1541 = vmatpush2.bf16.msra.mxu0 0
    %1542 = vmatprep.mubr.bf16.mxu0 0
    %1543 = vmatmul.mubr.bf16.gmra.mxu0 %v1505
    %v1544 = vpop.f32.mrf.mxu0
    %v1545 = vadd.f32 0.0, %v1544
    %v1546 = vpop.f32.mrf.mxu0
    %v1547 = vpop.f32.mrf.mxu0
    %v1548 = vadd.f32 0.0, %v1547
    %v1549 = vpop.f32.mrf.mxu0
    %1550 = vmatprep.mubr.bf16.mxu0 0
    %1551 = vmatmul.mubr.bf16.gmra.mxu0 %v1508
    %v1552 = vpop.f32.mrf.mxu0
    %v1553 = vadd.f32 0.0, %v1552
    %v1554 = vpop.f32.mrf.mxu0
    %v1555 = vpop.f32.mrf.mxu0
    %v1556 = vpop.f32.mrf.mxu0
    %1557 = vdwg.mxu0
    %v1558 = vadd.f32 %v1481, %v1545
    %v1559 = vadd.f32 %v1482, %v1548
    %v1560 = vadd.f32 %v1483, %v1553
    %v1561 = vld [vmem:[%s4 + $0xc0] sm:$0xf]
    %v1562 = vld [vmem:[%s4 + $0xc4] sm:$0xf]
    %v1563 = vld [vmem:[%s4 + $0xc8] sm:$0xf]
    %v1564 = vld [vmem:[%s4 + $0xcc] sm:$0xf]
    %v1566 = vrot.slane %v623, 4
    %v1567 = vrot.slane %v624, 4
    %v1568 = vsel %vm949, %v1566, %v1567
    %v1573 = vunpack.c.l.b16 %v1561
    %v1574 = vunpack.c.l.b16 %v1562
    %v1575 = vunpack.c.l.b16 %v1563
    %v1576 = vunpack.c.l.b16 %v1564
    %v1577 = vpack.c.b16 %v1574, %v1573
    %v1578 = vpack.c.b16 %v1576, %v1575
    %v1582 = vsel %vm645, %v1568, 0
    %v1585 = vsel %vm645, %v1567, 0
    %1587 = vmatprep.subr.bf16.mxu0 0
    %1588 = vmatpush1.bf16.msra.mxu0 0
    %1589 = vmatprep.subr.bf16.mxu0 0
    %1590 = vmatpush1.bf16.msra.mxu0 0
    %1591 = vmatprep.subr.bf16.mxu0 0
    %1592 = vmatpush1.bf16.msra.mxu0 0
    %1593 = vmatprep.subr.bf16.mxu0 0
    %1594 = vmatpush1.bf16.msra.mxu0 0
    %1595 = vmatprep.subr.bf16.mxu0 0
    %1596 = vmatpush1.bf16.msra.mxu0 0
    %1597 = vmatprep.subr.bf16.mxu0 0
    %1598 = vmatpush1.bf16.msra.mxu0 0
    %1599 = vmatprep.subr.bf16.mxu0 0
    %1600 = vmatpush1.bf16.msra.mxu0 %v1578
    %1601 = vmatprep.subr.bf16.mxu0 0
    %1602 = vmatpush1.bf16.msra.mxu0 %v1577
    %1603 = vmatprep.subr.bf16.mxu0 0
    %1604 = vmatpush2.bf16.msra.mxu0 0
    %1605 = vmatprep.subr.bf16.mxu0 0
    %1606 = vmatpush2.bf16.msra.mxu0 0
    %1607 = vmatprep.subr.bf16.mxu0 0
    %1608 = vmatpush2.bf16.msra.mxu0 0
    %1609 = vmatprep.subr.bf16.mxu0 0
    %1610 = vmatpush2.bf16.msra.mxu0 0
    %1611 = vmatprep.subr.bf16.mxu0 0
    %1612 = vmatpush2.bf16.msra.mxu0 0
    %1613 = vmatprep.subr.bf16.mxu0 0
    %1614 = vmatpush2.bf16.msra.mxu0 0
    %1615 = vmatprep.subr.bf16.mxu0 0
    %1616 = vmatpush2.bf16.msra.mxu0 0
    %1617 = vmatprep.subr.bf16.mxu0 0
    %1618 = vmatpush2.bf16.msra.mxu0 0
    %1619 = vmatprep.mubr.bf16.mxu0 0
    %1620 = vmatmul.mubr.bf16.gmra.mxu0 %v1582
    %v1621 = vpop.f32.mrf.mxu0
    %v1622 = vadd.f32 0.0, %v1621
    %v1623 = vpop.f32.mrf.mxu0
    %v1624 = vpop.f32.mrf.mxu0
    %v1625 = vadd.f32 0.0, %v1624
    %v1626 = vpop.f32.mrf.mxu0
    %1627 = vmatprep.mubr.bf16.mxu0 0
    %1628 = vmatmul.mubr.bf16.gmra.mxu0 %v1585
    %v1629 = vpop.f32.mrf.mxu0
    %v1630 = vadd.f32 0.0, %v1629
    %v1631 = vpop.f32.mrf.mxu0
    %v1632 = vpop.f32.mrf.mxu0
    %v1633 = vpop.f32.mrf.mxu0
    %1634 = vdwg.mxu0
    %v1635 = vadd.f32 %v1558, %v1622
    %v1636 = vadd.f32 %v1559, %v1625
    %v1637 = vadd.f32 %v1560, %v1630
    %v1638 = vld [vmem:[%s4 + $0xd0] sm:$0xf]
    %v1639 = vld [vmem:[%s4 + $0xd4] sm:$0xf]
    %v1640 = vld [vmem:[%s4 + $0xd8] sm:$0xf]
    %v1641 = vld [vmem:[%s4 + $0xdc] sm:$0xf]
    %v1643 = vrot.slane %v624, 5
    %v1644 = vrot.slane %v625, 5
    %v1645 = vsel %vm1027, %v1643, %v1644
    %v1650 = vunpack.c.l.b16 %v1638
    %v1651 = vunpack.c.l.b16 %v1639
    %v1652 = vunpack.c.l.b16 %v1640
    %v1653 = vunpack.c.l.b16 %v1641
    %v1654 = vpack.c.b16 %v1651, %v1650
    %v1655 = vpack.c.b16 %v1653, %v1652
    %v1659 = vsel %vm645, %v1645, 0
    %v1662 = vsel %vm645, %v1644, 0
    %1664 = vmatprep.subr.bf16.mxu0 0
    %1665 = vmatpush1.bf16.msra.mxu0 0
    %1666 = vmatprep.subr.bf16.mxu0 0
    %1667 = vmatpush1.bf16.msra.mxu0 0
    %1668 = vmatprep.subr.bf16.mxu0 0
    %1669 = vmatpush1.bf16.msra.mxu0 0
    %1670 = vmatprep.subr.bf16.mxu0 0
    %1671 = vmatpush1.bf16.msra.mxu0 0
    %1672 = vmatprep.subr.bf16.mxu0 0
    %1673 = vmatpush1.bf16.msra.mxu0 0
    %1674 = vmatprep.subr.bf16.mxu0 0
    %1675 = vmatpush1.bf16.msra.mxu0 0
    %1676 = vmatprep.subr.bf16.mxu0 0
    %1677 = vmatpush1.bf16.msra.mxu0 %v1655
    %1678 = vmatprep.subr.bf16.mxu0 0
    %1679 = vmatpush1.bf16.msra.mxu0 %v1654
    %1680 = vmatprep.subr.bf16.mxu0 0
    %1681 = vmatpush2.bf16.msra.mxu0 0
    %1682 = vmatprep.subr.bf16.mxu0 0
    %1683 = vmatpush2.bf16.msra.mxu0 0
    %1684 = vmatprep.subr.bf16.mxu0 0
    %1685 = vmatpush2.bf16.msra.mxu0 0
    %1686 = vmatprep.subr.bf16.mxu0 0
    %1687 = vmatpush2.bf16.msra.mxu0 0
    %1688 = vmatprep.subr.bf16.mxu0 0
    %1689 = vmatpush2.bf16.msra.mxu0 0
    %1690 = vmatprep.subr.bf16.mxu0 0
    %1691 = vmatpush2.bf16.msra.mxu0 0
    %1692 = vmatprep.subr.bf16.mxu0 0
    %1693 = vmatpush2.bf16.msra.mxu0 0
    %1694 = vmatprep.subr.bf16.mxu0 0
    %1695 = vmatpush2.bf16.msra.mxu0 0
    %1696 = vmatprep.mubr.bf16.mxu0 0
    %1697 = vmatmul.mubr.bf16.gmra.mxu0 %v1659
    %v1698 = vpop.f32.mrf.mxu0
    %v1699 = vadd.f32 0.0, %v1698
    %v1700 = vpop.f32.mrf.mxu0
    %v1701 = vpop.f32.mrf.mxu0
    %v1702 = vadd.f32 0.0, %v1701
    %v1703 = vpop.f32.mrf.mxu0
    %1704 = vmatprep.mubr.bf16.mxu0 0
    %1705 = vmatmul.mubr.bf16.gmra.mxu0 %v1662
    %v1706 = vpop.f32.mrf.mxu0
    %v1707 = vadd.f32 0.0, %v1706
    %v1708 = vpop.f32.mrf.mxu0
    %v1709 = vpop.f32.mrf.mxu0
    %v1710 = vpop.f32.mrf.mxu0
    %1711 = vdwg.mxu0
    %v1712 = vadd.f32 %v1635, %v1699
    %v1713 = vadd.f32 %v1636, %v1702
    %v1714 = vadd.f32 %v1637, %v1707
    %v1715 = vld [vmem:[%s4 + $0xe0] sm:$0xf]
    %v1716 = vld [vmem:[%s4 + $0xe4] sm:$0xf]
    %v1717 = vld [vmem:[%s4 + $0xe8] sm:$0xf]
    %v1718 = vld [vmem:[%s4 + $0xec] sm:$0xf]
    %v1720 = vrot.slane %v625, 6
    %v1721 = vrot.slane %v626, 6
    %v1722 = vsel %vm1105, %v1720, %v1721
    %v1727 = vunpack.c.l.b16 %v1715
    %v1728 = vunpack.c.l.b16 %v1716
    %v1729 = vunpack.c.l.b16 %v1717
    %v1730 = vunpack.c.l.b16 %v1718
    %v1731 = vpack.c.b16 %v1728, %v1727
    %v1732 = vpack.c.b16 %v1730, %v1729
    %v1736 = vsel %vm645, %v1722, 0
    %v1739 = vsel %vm645, %v1721, 0
    %1741 = vmatprep.subr.bf16.mxu0 0
    %1742 = vmatpush1.bf16.msra.mxu0 0
    %1743 = vmatprep.subr.bf16.mxu0 0
    %1744 = vmatpush1.bf16.msra.mxu0 0
    %1745 = vmatprep.subr.bf16.mxu0 0
    %1746 = vmatpush1.bf16.msra.mxu0 0
    %1747 = vmatprep.subr.bf16.mxu0 0
    %1748 = vmatpush1.bf16.msra.mxu0 0
    %1749 = vmatprep.subr.bf16.mxu0 0
    %1750 = vmatpush1.bf16.msra.mxu0 0
    %1751 = vmatprep.subr.bf16.mxu0 0
    %1752 = vmatpush1.bf16.msra.mxu0 0
    %1753 = vmatprep.subr.bf16.mxu0 0
    %1754 = vmatpush1.bf16.msra.mxu0 %v1732
    %1755 = vmatprep.subr.bf16.mxu0 0
    %1756 = vmatpush1.bf16.msra.mxu0 %v1731
    %1757 = vmatprep.subr.bf16.mxu0 0
    %1758 = vmatpush2.bf16.msra.mxu0 0
    %1759 = vmatprep.subr.bf16.mxu0 0
    %1760 = vmatpush2.bf16.msra.mxu0 0
    %1761 = vmatprep.subr.bf16.mxu0 0
    %1762 = vmatpush2.bf16.msra.mxu0 0
    %1763 = vmatprep.subr.bf16.mxu0 0
    %1764 = vmatpush2.bf16.msra.mxu0 0
    %1765 = vmatprep.subr.bf16.mxu0 0
    %1766 = vmatpush2.bf16.msra.mxu0 0
    %1767 = vmatprep.subr.bf16.mxu0 0
    %1768 = vmatpush2.bf16.msra.mxu0 0
    %1769 = vmatprep.subr.bf16.mxu0 0
    %1770 = vmatpush2.bf16.msra.mxu0 0
    %1771 = vmatprep.subr.bf16.mxu0 0
    %1772 = vmatpush2.bf16.msra.mxu0 0
    %1773 = vmatprep.mubr.bf16.mxu0 0
    %1774 = vmatmul.mubr.bf16.gmra.mxu0 %v1736
    %v1775 = vpop.f32.mrf.mxu0
    %v1776 = vadd.f32 0.0, %v1775
    %v1777 = vpop.f32.mrf.mxu0
    %v1778 = vpop.f32.mrf.mxu0
    %v1779 = vadd.f32 0.0, %v1778
    %v1780 = vpop.f32.mrf.mxu0
    %1781 = vmatprep.mubr.bf16.mxu0 0
    %1782 = vmatmul.mubr.bf16.gmra.mxu0 %v1739
    %v1783 = vpop.f32.mrf.mxu0
    %v1784 = vadd.f32 0.0, %v1783
    %v1785 = vpop.f32.mrf.mxu0
    %v1786 = vpop.f32.mrf.mxu0
    %v1787 = vpop.f32.mrf.mxu0
    %1788 = vdwg.mxu0
    %v1789 = vadd.f32 %v1712, %v1776
    %v1790 = vadd.f32 %v1713, %v1779
    %v1791 = vadd.f32 %v1714, %v1784
    %v1792 = vld [vmem:[%s4 + $0xf0] sm:$0xf]
    %v1793 = vld [vmem:[%s4 + $0xf4] sm:$0xf]
    %v1794 = vld [vmem:[%s4 + $0xf8] sm:$0xf]
    %v1795 = vld [vmem:[%s4 + $0xfc] sm:$0xf]
    %v1797 = vrot.slane %v626, 7
    %v1798 = vrot.slane %v627, 7
    %v1799 = vsel %vm1183, %v1797, %v1798
    %v1804 = vunpack.c.l.b16 %v1792
    %v1805 = vunpack.c.l.b16 %v1793
    %v1806 = vunpack.c.l.b16 %v1794
    %v1807 = vunpack.c.l.b16 %v1795
    %v1808 = vpack.c.b16 %v1805, %v1804
    %v1809 = vpack.c.b16 %v1807, %v1806
    %v1813 = vsel %vm645, %v1799, 0
    %v1816 = vsel %vm645, %v1798, 0
    %1818 = vmatprep.subr.bf16.mxu0 0
    %1819 = vmatpush1.bf16.msra.mxu0 0
    %1820 = vmatprep.subr.bf16.mxu0 0
    %1821 = vmatpush1.bf16.msra.mxu0 0
    %1822 = vmatprep.subr.bf16.mxu0 0
    %1823 = vmatpush1.bf16.msra.mxu0 0
    %1824 = vmatprep.subr.bf16.mxu0 0
    %1825 = vmatpush1.bf16.msra.mxu0 0
    %1826 = vmatprep.subr.bf16.mxu0 0
    %1827 = vmatpush1.bf16.msra.mxu0 0
    %1828 = vmatprep.subr.bf16.mxu0 0
    %1829 = vmatpush1.bf16.msra.mxu0 0
    %1830 = vmatprep.subr.bf16.mxu0 0
    %1831 = vmatpush1.bf16.msra.mxu0 %v1809
    %1832 = vmatprep.subr.bf16.mxu0 0
    %1833 = vmatpush1.bf16.msra.mxu0 %v1808
    %1834 = vmatprep.subr.bf16.mxu0 0
    %1835 = vmatpush2.bf16.msra.mxu0 0
    %1836 = vmatprep.subr.bf16.mxu0 0
    %1837 = vmatpush2.bf16.msra.mxu0 0
    %1838 = vmatprep.subr.bf16.mxu0 0
    %1839 = vmatpush2.bf16.msra.mxu0 0
    %1840 = vmatprep.subr.bf16.mxu0 0
    %1841 = vmatpush2.bf16.msra.mxu0 0
    %1842 = vmatprep.subr.bf16.mxu0 0
    %1843 = vmatpush2.bf16.msra.mxu0 0
    %1844 = vmatprep.subr.bf16.mxu0 0
    %1845 = vmatpush2.bf16.msra.mxu0 0
    %1846 = vmatprep.subr.bf16.mxu0 0
    %1847 = vmatpush2.bf16.msra.mxu0 0
    %1848 = vmatprep.subr.bf16.mxu0 0
    %1849 = vmatpush2.bf16.msra.mxu0 0
    %1850 = vmatprep.mubr.bf16.mxu0 0
    %1851 = vmatmul.mubr.bf16.gmra.mxu0 %v1813
    %v1852 = vpop.f32.mrf.mxu0
    %v1853 = vadd.f32 0.0, %v1852
    %v1854 = vpop.f32.mrf.mxu0
    %v1855 = vpop.f32.mrf.mxu0
    %v1856 = vadd.f32 0.0, %v1855
    %v1857 = vpop.f32.mrf.mxu0
    %1858 = vmatprep.mubr.bf16.mxu0 0
    %1859 = vmatmul.mubr.bf16.gmra.mxu0 %v1816
    %v1860 = vpop.f32.mrf.mxu0
    %v1861 = vadd.f32 0.0, %v1860
    %v1862 = vpop.f32.mrf.mxu0
    %v1863 = vpop.f32.mrf.mxu0
    %v1864 = vpop.f32.mrf.mxu0
    %1865 = vdwg.mxu0
    %v1866 = vadd.f32 %v1789, %v1853
    %v1867 = vadd.f32 %v1790, %v1856
    %v1868 = vadd.f32 %v1791, %v1861
    %v1869 = vmax.f32 %v1866, 0.0
    %v1870 = vmax.f32 %v1867, 0.0
    %v1871 = vmax.f32 %v1868, 0.0
    %v1872 = vpack.c.bf16 %v1870, %v1869
    %v1873 = vpack.c.bf16 %v1871, %v1871
    %v1875 = vrot.slane %v1872, 1
    %1876 = vrot.lane.b32.xlu0 %v1875, 64
    %v1877 = vpop.permute.xlu0 %1876
    %v1878 = vrot.slane %v1872, 2
    %v1879 = vrot.slane %v1872, 3
    %1880 = vrot.lane.b32.xlu0 %v1879, 64
    %v1881 = vpop.permute.xlu0 %1880
    %v1882 = vrot.slane %v1872, 4
    %v1883 = vrot.slane %v1872, 5
    %1884 = vrot.lane.b32.xlu0 %v1883, 64
    %v1885 = vpop.permute.xlu0 %1884
    %v1886 = vrot.slane %v1872, 6
    %v1887 = vrot.slane %v1872, 7
    %1888 = vrot.lane.b32.xlu0 %v1887, 64
    %v1889 = vpop.permute.xlu0 %1888
    %vm1890 = vcmask 523264
    %v1893 = vsel %vm1890, %v1872, %v1877
    %v1897 = vsel %vm1890, %v1878, %v1881
    %v1901 = vsel %vm1890, %v1882, %v1885
    %v1905 = vsel %vm1890, %v1886, %v1889
    %v1907 = vld [vmem:[%s6] sm:$0xf]
    %v1908 = vld [vmem:[%s6 + $0x4] sm:$0xf]
    %v1909 = vld [vmem:[%s6 + $0x8] sm:$0xf]
    %v1910 = vld [vmem:[%s6 + $0xc] sm:$0xf]
    %v1911 = vld [vmem:[%s6 + $0x10] sm:$0xf]
    %v1912 = vld [vmem:[%s6 + $0x14] sm:$0xf]
    %v1913 = vld [vmem:[%s6 + $0x18] sm:$0xf]
    %v1914 = vld [vmem:[%s6 + $0x1c] sm:$0xf]
    %v1915 = vld [vmem:[%s6 + $0x20] sm:$0xf]
    %v1916 = vld [vmem:[%s6 + $0x24] sm:$0xf]
    %v1917 = vld [vmem:[%s6 + $0x28] sm:$0xf]
    %v1918 = vld [vmem:[%s6 + $0x2c] sm:$0xf]
    %v1919 = vld [vmem:[%s6 + $0x30] sm:$0xf]
    %v1920 = vld [vmem:[%s6 + $0x34] sm:$0xf]
    %v1921 = vld [vmem:[%s6 + $0x38] sm:$0xf]
    %v1922 = vld [vmem:[%s6 + $0x3c] sm:$0xf]
    %v1923 = vld [vmem:[%s6 + $0x40] sm:$0xf]
    %v1924 = vld [vmem:[%s6 + $0x44] sm:$0xf]
    %v1925 = vld [vmem:[%s6 + $0x48] sm:$0xf]
    %v1926 = vld [vmem:[%s6 + $0x4c] sm:$0xf]
    %v1927 = vld [vmem:[%s6 + $0x50] sm:$0xf]
    %v1928 = vld [vmem:[%s6 + $0x54] sm:$0xf]
    %v1929 = vld [vmem:[%s6 + $0x58] sm:$0xf]
    %v1930 = vld [vmem:[%s6 + $0x5c] sm:$0xf]
    %v1931 = vld [vmem:[%s6 + $0x60] sm:$0xf]
    %v1932 = vld [vmem:[%s6 + $0x64] sm:$0xf]
    %v1933 = vld [vmem:[%s6 + $0x68] sm:$0xf]
    %v1934 = vld [vmem:[%s6 + $0x6c] sm:$0xf]
    %v1935 = vld [vmem:[%s6 + $0x70] sm:$0xf]
    %v1936 = vld [vmem:[%s6 + $0x74] sm:$0xf]
    %v1937 = vld [vmem:[%s6 + $0x78] sm:$0xf]
    %v1938 = vld [vmem:[%s6 + $0x7c] sm:$0xf]
    %v1939 = vld [vmem:[%s6 + $0x80] sm:$0xf]
    %v1940 = vld [vmem:[%s6 + $0x84] sm:$0xf]
    %v1941 = vld [vmem:[%s6 + $0x88] sm:$0xf]
    %v1942 = vld [vmem:[%s6 + $0x8c] sm:$0xf]
    %v1943 = vld [vmem:[%s6 + $0x90] sm:$0xf]
    %v1944 = vld [vmem:[%s6 + $0x94] sm:$0xf]
    %v1945 = vld [vmem:[%s6 + $0x98] sm:$0xf]
    %v1946 = vld [vmem:[%s6 + $0x9c] sm:$0xf]
    %v1947 = vld [vmem:[%s6 + $0xa0] sm:$0xf]
    %v1948 = vld [vmem:[%s6 + $0xa4] sm:$0xf]
    %v1949 = vld [vmem:[%s6 + $0xa8] sm:$0xf]
    %v1950 = vld [vmem:[%s6 + $0xac] sm:$0xf]
    %v1951 = vld [vmem:[%s6 + $0xb0] sm:$0xf]
    %v1952 = vld [vmem:[%s6 + $0xb4] sm:$0xf]
    %v1953 = vld [vmem:[%s6 + $0xb8] sm:$0xf]
    %v1954 = vld [vmem:[%s6 + $0xbc] sm:$0xf]
    %v1955 = vld [vmem:[%s6 + $0xc0] sm:$0xf]
    %v1956 = vld [vmem:[%s6 + $0xc4] sm:$0xf]
    %v1957 = vld [vmem:[%s6 + $0xc8] sm:$0xf]
    %v1958 = vld [vmem:[%s6 + $0xcc] sm:$0xf]
    %v1959 = vld [vmem:[%s6 + $0xd0] sm:$0xf]
    %v1960 = vld [vmem:[%s6 + $0xd4] sm:$0xf]
    %v1961 = vld [vmem:[%s6 + $0xd8] sm:$0xf]
    %v1962 = vld [vmem:[%s6 + $0xdc] sm:$0xf]
    %v1963 = vld [vmem:[%s6 + $0xe0] sm:$0xf]
    %v1964 = vld [vmem:[%s6 + $0xe4] sm:$0xf]
    %v1965 = vld [vmem:[%s6 + $0xe8] sm:$0xf]
    %v1966 = vld [vmem:[%s6 + $0xec] sm:$0xf]
    %v1967 = vld [vmem:[%s6 + $0xf0] sm:$0xf]
    %v1968 = vld [vmem:[%s6 + $0xf4] sm:$0xf]
    %v1969 = vld [vmem:[%s6 + $0xf8] sm:$0xf]
    %v1970 = vld [vmem:[%s6 + $0xfc] sm:$0xf]
    %v1971 = vld [vmem:[%s6 + $0x100] sm:$0xf]
    %v1972 = vld [vmem:[%s6 + $0x104] sm:$0xf]
    %v1973 = vld [vmem:[%s6 + $0x108] sm:$0xf]
    %v1974 = vld [vmem:[%s6 + $0x10c] sm:$0xf]
    %v1975 = vld [vmem:[%s6 + $0x110] sm:$0xf]
    %v1976 = vld [vmem:[%s6 + $0x114] sm:$0xf]
    %v1977 = vld [vmem:[%s6 + $0x118] sm:$0xf]
    %v1978 = vld [vmem:[%s6 + $0x11c] sm:$0xf]
    %v1979 = vld [vmem:[%s7] sm:$0x1]
    %v1981 = vlaneseq
    %v1982 = vshrl.u32 %v1981, 7
    %v1983 = vsub.s32 0, %v1982
    %v1984 = vrot.slane %v1979, %v1983
    %v2058 = vunpack.c.l.b16 %v1907
    %v2059 = vunpack.c.l.b16 %v1908
    %v2060 = vunpack.c.l.b16 %v1909
    %v2061 = vunpack.c.l.b16 %v1910
    %v2062 = vunpack.c.l.b16 %v1911
    %v2063 = vunpack.c.l.b16 %v1912
    %v2064 = vunpack.c.l.b16 %v1913
    %v2065 = vunpack.c.l.b16 %v1914
    %v2066 = vunpack.c.l.b16 %v1915
    %v2067 = vunpack.c.l.b16 %v1916
    %v2068 = vunpack.c.l.b16 %v1917
    %v2069 = vunpack.c.l.b16 %v1918
    %v2070 = vunpack.c.l.b16 %v1919
    %v2071 = vunpack.c.l.b16 %v1920
    %v2072 = vunpack.c.l.b16 %v1921
    %v2073 = vunpack.c.l.b16 %v1922
    %v2074 = vunpack.c.l.b16 %v1923
    %v2075 = vunpack.c.l.b16 %v1924
    %v2076 = vunpack.c.l.b16 %v1925
    %v2077 = vunpack.c.l.b16 %v1926
    %v2078 = vunpack.c.l.b16 %v1927
    %v2079 = vunpack.c.l.b16 %v1928
    %v2080 = vunpack.c.l.b16 %v1929
    %v2081 = vunpack.c.l.b16 %v1930
    %v2082 = vunpack.c.l.b16 %v1931
    %v2083 = vunpack.c.l.b16 %v1932
    %v2084 = vunpack.c.l.b16 %v1933
    %v2085 = vunpack.c.l.b16 %v1934
    %v2086 = vunpack.c.l.b16 %v1935
    %v2087 = vunpack.c.l.b16 %v1936
    %v2088 = vunpack.c.l.b16 %v1937
    %v2089 = vunpack.c.l.b16 %v1938
    %v2090 = vunpack.c.l.b16 %v1939
    %v2091 = vunpack.c.l.b16 %v1940
    %v2092 = vunpack.c.l.b16 %v1941
    %v2093 = vunpack.c.l.b16 %v1942
    %v2094 = vunpack.c.l.b16 %v1943
    %v2095 = vunpack.c.l.b16 %v1944
    %v2096 = vunpack.c.l.b16 %v1945
    %v2097 = vunpack.c.l.b16 %v1946
    %v2098 = vunpack.c.l.b16 %v1947
    %v2099 = vunpack.c.l.b16 %v1948
    %v2100 = vunpack.c.l.b16 %v1949
    %v2101 = vunpack.c.l.b16 %v1950
    %v2102 = vunpack.c.l.b16 %v1951
    %v2103 = vunpack.c.l.b16 %v1952
    %v2104 = vunpack.c.l.b16 %v1953
    %v2105 = vunpack.c.l.b16 %v1954
    %v2106 = vunpack.c.l.b16 %v1955
    %v2107 = vunpack.c.l.b16 %v1956
    %v2108 = vunpack.c.l.b16 %v1957
    %v2109 = vunpack.c.l.b16 %v1958
    %v2110 = vunpack.c.l.b16 %v1959
    %v2111 = vunpack.c.l.b16 %v1960
    %v2112 = vunpack.c.l.b16 %v1961
    %v2113 = vunpack.c.l.b16 %v1962
    %v2114 = vunpack.c.l.b16 %v1963
    %v2115 = vunpack.c.l.b16 %v1964
    %v2116 = vunpack.c.l.b16 %v1965
    %v2117 = vunpack.c.l.b16 %v1966
    %v2118 = vunpack.c.l.b16 %v1967
    %v2119 = vunpack.c.l.b16 %v1968
    %v2120 = vunpack.c.l.b16 %v1969
    %v2121 = vunpack.c.l.b16 %v1970
    %v2122 = vunpack.c.l.b16 %v1971
    %v2123 = vunpack.c.l.b16 %v1972
    %v2124 = vunpack.c.l.b16 %v1973
    %v2125 = vunpack.c.l.b16 %v1974
    %v2126 = vunpack.c.l.b16 %v1975
    %v2127 = vunpack.c.l.b16 %v1976
    %v2128 = vunpack.c.l.b16 %v1977
    %v2129 = vunpack.c.l.b16 %v1978
    %v2130 = vpack.c.b16 %v2059, %v2058
    %v2131 = vpack.c.b16 %v2061, %v2060
    %v2132 = vpack.c.b16 %v2063, %v2062
    %v2133 = vpack.c.b16 %v2065, %v2064
    %v2134 = vpack.c.b16 %v2067, %v2066
    %v2135 = vpack.c.b16 %v2069, %v2068
    %v2136 = vpack.c.b16 %v2071, %v2070
    %v2137 = vpack.c.b16 %v2073, %v2072
    %v2138 = vpack.c.b16 %v2075, %v2074
    %v2139 = vpack.c.b16 %v2077, %v2076
    %v2140 = vpack.c.b16 %v2079, %v2078
    %v2141 = vpack.c.b16 %v2081, %v2080
    %v2142 = vpack.c.b16 %v2083, %v2082
    %v2143 = vpack.c.b16 %v2085, %v2084
    %v2144 = vpack.c.b16 %v2087, %v2086
    %v2145 = vpack.c.b16 %v2089, %v2088
    %v2146 = vpack.c.b16 %v2091, %v2090
    %v2147 = vpack.c.b16 %v2093, %v2092
    %v2148 = vpack.c.b16 %v2095, %v2094
    %v2149 = vpack.c.b16 %v2097, %v2096
    %v2150 = vpack.c.b16 %v2099, %v2098
    %v2151 = vpack.c.b16 %v2101, %v2100
    %v2152 = vpack.c.b16 %v2103, %v2102
    %v2153 = vpack.c.b16 %v2105, %v2104
    %v2154 = vpack.c.b16 %v2107, %v2106
    %v2155 = vpack.c.b16 %v2109, %v2108
    %v2156 = vpack.c.b16 %v2111, %v2110
    %v2157 = vpack.c.b16 %v2113, %v2112
    %v2158 = vpack.c.b16 %v2115, %v2114
    %v2159 = vpack.c.b16 %v2117, %v2116
    %v2160 = vpack.c.b16 %v2119, %v2118
    %v2161 = vpack.c.b16 %v2121, %v2120
    %v2162 = vpack.c.b16 %v2123, %v2122
    %v2163 = vpack.c.b16 %v2125, %v2124
    %v2164 = vpack.c.b16 %v2127, %v2126
    %v2165 = vpack.c.b16 %v2129, %v2128
    %v2203 = vsel %vm1890, %v1873, 0
    %2205 = vmatprep.subr.bf16.mxu0 0
    %2206 = vmatpush1.bf16.msra.mxu0 %v2137
    %2207 = vmatprep.subr.bf16.mxu0 0
    %2208 = vmatpush1.bf16.msra.mxu0 %v2136
    %2209 = vmatprep.subr.bf16.mxu0 0
    %2210 = vmatpush1.bf16.msra.mxu0 %v2135
    %2211 = vmatprep.subr.bf16.mxu0 0
    %2212 = vmatpush1.bf16.msra.mxu0 %v2134
    %2213 = vmatprep.subr.bf16.mxu0 0
    %2214 = vmatpush1.bf16.msra.mxu0 %v2133
    %2215 = vmatprep.subr.bf16.mxu0 0
    %2216 = vmatpush1.bf16.msra.mxu0 %v2132
    %2217 = vmatprep.subr.bf16.mxu0 0
    %2218 = vmatpush1.bf16.msra.mxu0 %v2131
    %2219 = vmatprep.subr.bf16.mxu0 0
    %2220 = vmatpush1.bf16.msra.mxu0 %v2130
    %2221 = vmatprep.subr.bf16.mxu0 0
    %2222 = vmatpush2.bf16.msra.mxu0 %v2145
    %2223 = vmatprep.subr.bf16.mxu0 0
    %2224 = vmatpush2.bf16.msra.mxu0 %v2144
    %2225 = vmatprep.subr.bf16.mxu0 0
    %2226 = vmatpush2.bf16.msra.mxu0 %v2143
    %2227 = vmatprep.subr.bf16.mxu0 0
    %2228 = vmatpush2.bf16.msra.mxu0 %v2142
    %2229 = vmatprep.subr.bf16.mxu0 0
    %2230 = vmatpush2.bf16.msra.mxu0 %v2141
    %2231 = vmatprep.subr.bf16.mxu0 0
    %2232 = vmatpush2.bf16.msra.mxu0 %v2140
    %2233 = vmatprep.subr.bf16.mxu0 0
    %2234 = vmatpush2.bf16.msra.mxu0 %v2139
    %2235 = vmatprep.subr.bf16.mxu0 0
    %2236 = vmatpush2.bf16.msra.mxu0 %v2138
    %2237 = vmatprep.mubr.bf16.mxu0 %v1897
    %2238 = vmatmul.mubr.bf16.gmra.mxu0 %v1893
    %v2239 = vpop.f32.mrf.mxu0
    %v2240 = vadd.f32 %v1984, %v2239
    %v2241 = vpop.f32.mrf.mxu0
    %v2242 = vpop.f32.mrf.mxu0
    %v2243 = vpop.f32.mrf.mxu0
    %2244 = vdwg.mxu0
    %2245 = vmatprep.subr.bf16.mxu0 0
    %2246 = vmatpush1.bf16.msra.mxu0 %v2153
    %2247 = vmatprep.subr.bf16.mxu0 0
    %2248 = vmatpush1.bf16.msra.mxu0 %v2152
    %2249 = vmatprep.subr.bf16.mxu0 0
    %2250 = vmatpush1.bf16.msra.mxu0 %v2151
    %2251 = vmatprep.subr.bf16.mxu0 0
    %2252 = vmatpush1.bf16.msra.mxu0 %v2150
    %2253 = vmatprep.subr.bf16.mxu0 0
    %2254 = vmatpush1.bf16.msra.mxu0 %v2149
    %2255 = vmatprep.subr.bf16.mxu0 0
    %2256 = vmatpush1.bf16.msra.mxu0 %v2148
    %2257 = vmatprep.subr.bf16.mxu0 0
    %2258 = vmatpush1.bf16.msra.mxu0 %v2147
    %2259 = vmatprep.subr.bf16.mxu0 0
    %2260 = vmatpush1.bf16.msra.mxu0 %v2146
    %2261 = vmatprep.subr.bf16.mxu0 0
    %2262 = vmatpush2.bf16.msra.mxu0 %v2161
    %2263 = vmatprep.subr.bf16.mxu0 0
    %2264 = vmatpush2.bf16.msra.mxu0 %v2160
    %2265 = vmatprep.subr.bf16.mxu0 0
    %2266 = vmatpush2.bf16.msra.mxu0 %v2159
    %2267 = vmatprep.subr.bf16.mxu0 0
    %2268 = vmatpush2.bf16.msra.mxu0 %v2158
    %2269 = vmatprep.subr.bf16.mxu0 0
    %2270 = vmatpush2.bf16.msra.mxu0 %v2157
    %2271 = vmatprep.subr.bf16.mxu0 0
    %2272 = vmatpush2.bf16.msra.mxu0 %v2156
    %2273 = vmatprep.subr.bf16.mxu0 0
    %2274 = vmatpush2.bf16.msra.mxu0 %v2155
    %2275 = vmatprep.subr.bf16.mxu0 0
    %2276 = vmatpush2.bf16.msra.mxu0 %v2154
    %2277 = vmatprep.mubr.bf16.mxu0 %v1905
    %2278 = vmatmul.mubr.bf16.gmra.mxu0 %v1901
    %v2279 = vpop.f32.mrf.mxu0
    %v2280 = vadd.f32 %v2240, %v2279
    %v2281 = vpop.f32.mrf.mxu0
    %v2282 = vpop.f32.mrf.mxu0
    %v2283 = vpop.f32.mrf.mxu0
    %2284 = vdwg.mxu0
    %2285 = vmatprep.subr.bf16.mxu0 0
    %2286 = vmatpush1.bf16.msra.mxu0 0
    %2287 = vmatprep.subr.bf16.mxu0 0
    %2288 = vmatpush1.bf16.msra.mxu0 0
    %2289 = vmatprep.subr.bf16.mxu0 0
    %2290 = vmatpush1.bf16.msra.mxu0 0
    %2291 = vmatprep.subr.bf16.mxu0 0
    %2292 = vmatpush1.bf16.msra.mxu0 0
    %2293 = vmatprep.subr.bf16.mxu0 0
    %2294 = vmatpush1.bf16.msra.mxu0 %v2165
    %2295 = vmatprep.subr.bf16.mxu0 0
    %2296 = vmatpush1.bf16.msra.mxu0 %v2164
    %2297 = vmatprep.subr.bf16.mxu0 0
    %2298 = vmatpush1.bf16.msra.mxu0 %v2163
    %2299 = vmatprep.subr.bf16.mxu0 0
    %2300 = vmatpush1.bf16.msra.mxu0 %v2162
    %2301 = vmatprep.subr.bf16.mxu0 0
    %2302 = vmatpush2.bf16.msra.mxu0 0
    %2303 = vmatprep.subr.bf16.mxu0 0
    %2304 = vmatpush2.bf16.msra.mxu0 0
    %2305 = vmatprep.subr.bf16.mxu0 0
    %2306 = vmatpush2.bf16.msra.mxu0 0
    %2307 = vmatprep.subr.bf16.mxu0 0
    %2308 = vmatpush2.bf16.msra.mxu0 0
    %2309 = vmatprep.subr.bf16.mxu0 0
    %2310 = vmatpush2.bf16.msra.mxu0 0
    %2311 = vmatprep.subr.bf16.mxu0 0
    %2312 = vmatpush2.bf16.msra.mxu0 0
    %2313 = vmatprep.subr.bf16.mxu0 0
    %2314 = vmatpush2.bf16.msra.mxu0 0
    %2315 = vmatprep.subr.bf16.mxu0 0
    %2316 = vmatpush2.bf16.msra.mxu0 0
    %2317 = vmatprep.mubr.bf16.mxu0 0
    %2318 = vmatmul.mubr.bf16.gmra.mxu0 %v2203
    %v2319 = vpop.f32.mrf.mxu0
    %v2320 = vadd.f32 %v2280, %v2319
    %v2321 = vpop.f32.mrf.mxu0
    %v2322 = vpop.f32.mrf.mxu0
    %v2323 = vpop.f32.mrf.mxu0
    %2324 = vdwg.mxu0
    %v2325 = vmax.f32 %v2320, 0.0
    %v2326 = vpack.c.bf16 %v2325, %v2325
    %v2327 = vld [vmem:[%s8] sm:$0xff]
    %v2328 = vld [vmem:[%s8 + $0x8] sm:$0xff]
    %v2329 = vld [vmem:[%s8 + $0x10] sm:$0xff]
    %v2330 = vld [vmem:[%s8 + $0x18] sm:$0xff]
    %v2331 = vld [vmem:[%s8 + $0x20] sm:$0xff]
    %v2332 = vld [vmem:[%s8 + $0x28] sm:$0xff]
    %v2333 = vld [vmem:[%s8 + $0x30] sm:$0xff]
    %v2334 = vld [vmem:[%s8 + $0x38] sm:$0xff]
    %v2335 = vld [vmem:[%s8 + $0x40] sm:$0xff]
    %v2336 = vld [vmem:[%s8 + $0x48] sm:$0xff]
    %v2337 = vld [vmem:[%s8 + $0x50] sm:$0xff]
    %v2338 = vld [vmem:[%s8 + $0x58] sm:$0xff]
    %v2339 = vld [vmem:[%s8 + $0x60] sm:$0xff]
    %v2340 = vld [vmem:[%s8 + $0x68] sm:$0xff]
    %v2341 = vld [vmem:[%s8 + $0x70] sm:$0xff]
    %v2342 = vld [vmem:[%s8 + $0x78] sm:$0xff]
    %v2343 = vld [vmem:[%s1] sm:$0x3]
    %v2344 = vld [vmem:[%s9] ss:$2 sm:$0xf]
    %2346 = vset.pattern.permute.xlu0 0
    %2347 = vperm.xlu0 %2346, %v2343
    %v2348 = vpop.permute.xlu0 %2347
    %v2351 = vlaneseq
    %v2352 = vshrl.u32 %v2351, 7
    %v2353 = vsub.s32 0, %v2352
    %v2354 = vrot.slane %v2344, %v2353
    %v2355 = vlaneseq
    %v2356 = vshrl.u32 %v2355, 7
    %v2357 = vsub.s32 1, %v2356
    %v2358 = vrot.slane %v2344, %v2357
    %v2359 = vlaneseq
    %v2360 = vshrl.u32 %v2359, 7
    %v2361 = vsub.s32 2, %v2360
    %v2362 = vrot.slane %v2344, %v2361
    %v2363 = vlaneseq
    %v2364 = vshrl.u32 %v2363, 7
    %v2365 = vsub.s32 3, %v2364
    %v2366 = vrot.slane %v2344, %v2365
    %v2371 = vmul.f32 %v2348, %v2354
    %v2372 = vmul.f32 %v2348, %v2358
    %v2373 = vmul.f32 %v2348, %v2362
    %v2374 = vmul.f32 %v2348, %v2366
    %v2391 = vunpack.c.l.b16 %v2327
    %v2392 = vunpack.c.h.b16 %v2327
    %v2393 = vunpack.c.l.b16 %v2328
    %v2394 = vunpack.c.h.b16 %v2328
    %v2395 = vunpack.c.l.b16 %v2329
    %v2396 = vunpack.c.h.b16 %v2329
    %v2397 = vunpack.c.l.b16 %v2330
    %v2398 = vunpack.c.h.b16 %v2330
    %v2399 = vunpack.c.l.b16 %v2331
    %v2400 = vunpack.c.h.b16 %v2331
    %v2401 = vunpack.c.l.b16 %v2332
    %v2402 = vunpack.c.h.b16 %v2332
    %v2403 = vunpack.c.l.b16 %v2333
    %v2404 = vunpack.c.h.b16 %v2333
    %v2405 = vunpack.c.l.b16 %v2334
    %v2406 = vunpack.c.h.b16 %v2334
    %v2407 = vunpack.c.l.b16 %v2335
    %v2408 = vunpack.c.h.b16 %v2335
    %v2409 = vunpack.c.l.b16 %v2336
    %v2410 = vunpack.c.h.b16 %v2336
    %v2411 = vunpack.c.l.b16 %v2337
    %v2412 = vunpack.c.h.b16 %v2337
    %v2413 = vunpack.c.l.b16 %v2338
    %v2414 = vunpack.c.h.b16 %v2338
    %v2415 = vunpack.c.l.b16 %v2339
    %v2416 = vunpack.c.h.b16 %v2339
    %v2417 = vunpack.c.l.b16 %v2340
    %v2418 = vunpack.c.h.b16 %v2340
    %v2419 = vunpack.c.l.b16 %v2341
    %v2420 = vunpack.c.h.b16 %v2341
    %v2421 = vunpack.c.l.b16 %v2342
    %v2422 = vunpack.c.h.b16 %v2342
    %v2423 = vpack.c.b16 %v2395, %v2391
    %v2424 = vpack.c.b16 %v2396, %v2392
    %v2425 = vpack.c.b16 %v2397, %v2393
    %v2426 = vpack.c.b16 %v2398, %v2394
    %v2427 = vpack.c.b16 %v2403, %v2399
    %v2428 = vpack.c.b16 %v2404, %v2400
    %v2429 = vpack.c.b16 %v2405, %v2401
    %v2430 = vpack.c.b16 %v2406, %v2402
    %v2431 = vpack.c.b16 %v2411, %v2407
    %v2432 = vpack.c.b16 %v2412, %v2408
    %v2433 = vpack.c.b16 %v2413, %v2409
    %v2434 = vpack.c.b16 %v2414, %v2410
    %v2435 = vpack.c.b16 %v2419, %v2415
    %v2436 = vpack.c.b16 %v2420, %v2416
    %v2437 = vpack.c.b16 %v2421, %v2417
    %v2438 = vpack.c.b16 %v2422, %v2418
    %v2456 = vsel %vm1890, %v2326, 0
    %2458 = vmatprep.subr.bf16.mxu0 0
    %2459 = vmatpush1.bf16.msra.mxu0 0
    %2460 = vmatprep.subr.bf16.mxu0 0
    %2461 = vmatpush1.bf16.msra.mxu0 0
    %2462 = vmatprep.subr.bf16.mxu0 0
    %2463 = vmatpush1.bf16.msra.mxu0 0
    %2464 = vmatprep.subr.bf16.mxu0 0
    %2465 = vmatpush1.bf16.msra.mxu0 0
    %2466 = vmatprep.subr.bf16.mxu0 %v2436
    %2467 = vmatpush1.bf16.msra.mxu0 %v2435
    %2468 = vmatprep.subr.bf16.mxu0 %v2432
    %2469 = vmatpush1.bf16.msra.mxu0 %v2431
    %2470 = vmatprep.subr.bf16.mxu0 %v2428
    %2471 = vmatpush1.bf16.msra.mxu0 %v2427
    %2472 = vmatprep.subr.bf16.mxu0 %v2424
    %2473 = vmatpush1.bf16.msra.mxu0 %v2423
    %2474 = vmatprep.subr.bf16.mxu0 0
    %2475 = vmatpush2.bf16.msra.mxu0 0
    %2476 = vmatprep.subr.bf16.mxu0 0
    %2477 = vmatpush2.bf16.msra.mxu0 0
    %2478 = vmatprep.subr.bf16.mxu0 0
    %2479 = vmatpush2.bf16.msra.mxu0 0
    %2480 = vmatprep.subr.bf16.mxu0 0
    %2481 = vmatpush2.bf16.msra.mxu0 0
    %2482 = vmatprep.subr.bf16.mxu0 0
    %2483 = vmatpush2.bf16.msra.mxu0 0
    %2484 = vmatprep.subr.bf16.mxu0 0
    %2485 = vmatpush2.bf16.msra.mxu0 0
    %2486 = vmatprep.subr.bf16.mxu0 0
    %2487 = vmatpush2.bf16.msra.mxu0 0
    %2488 = vmatprep.subr.bf16.mxu0 0
    %2489 = vmatpush2.bf16.msra.mxu0 0
    %2490 = vmatprep.mubr.bf16.mxu0 0
    %2491 = vmatmul.mubr.bf16.gmra.mxu0 %v2456
    %v2492 = vpop.f32.mrf.mxu0
    %v2493 = vadd.f32 %v2371, %v2492
    %v2494 = vpop.f32.mrf.mxu0
    %v2495 = vadd.f32 %v2372, %v2494
    %v2496 = vpop.f32.mrf.mxu0
    %v2497 = vpop.f32.mrf.mxu0
    %2498 = vdwg.mxu0
    %2499 = vmatprep.subr.bf16.mxu0 0
    %2500 = vmatpush1.bf16.msra.mxu0 0
    %2501 = vmatprep.subr.bf16.mxu0 0
    %2502 = vmatpush1.bf16.msra.mxu0 0
    %2503 = vmatprep.subr.bf16.mxu0 0
    %2504 = vmatpush1.bf16.msra.mxu0 0
    %2505 = vmatprep.subr.bf16.mxu0 0
    %2506 = vmatpush1.bf16.msra.mxu0 0
    %2507 = vmatprep.subr.bf16.mxu0 %v2438
    %2508 = vmatpush1.bf16.msra.mxu0 %v2437
    %2509 = vmatprep.subr.bf16.mxu0 %v2434
    %2510 = vmatpush1.bf16.msra.mxu0 %v2433
    %2511 = vmatprep.subr.bf16.mxu0 %v2430
    %2512 = vmatpush1.bf16.msra.mxu0 %v2429
    %2513 = vmatprep.subr.bf16.mxu0 %v2426
    %2514 = vmatpush1.bf16.msra.mxu0 %v2425
    %2515 = vmatprep.subr.bf16.mxu0 0
    %2516 = vmatpush2.bf16.msra.mxu0 0
    %2517 = vmatprep.subr.bf16.mxu0 0
    %2518 = vmatpush2.bf16.msra.mxu0 0
    %2519 = vmatprep.subr.bf16.mxu0 0
    %2520 = vmatpush2.bf16.msra.mxu0 0
    %2521 = vmatprep.subr.bf16.mxu0 0
    %2522 = vmatpush2.bf16.msra.mxu0 0
    %2523 = vmatprep.subr.bf16.mxu0 0
    %2524 = vmatpush2.bf16.msra.mxu0 0
    %2525 = vmatprep.subr.bf16.mxu0 0
    %2526 = vmatpush2.bf16.msra.mxu0 0
    %2527 = vmatprep.subr.bf16.mxu0 0
    %2528 = vmatpush2.bf16.msra.mxu0 0
    %2529 = vmatprep.subr.bf16.mxu0 0
    %2530 = vmatpush2.bf16.msra.mxu0 0
    %2531 = vmatprep.mubr.bf16.mxu0 0
    %2532 = vmatmul.mubr.bf16.gmra.mxu0 %v2456
    %v2533 = vpop.f32.mrf.mxu0
    %v2534 = vadd.f32 %v2373, %v2533
    %v2535 = vpop.f32.mrf.mxu0
    %v2536 = vadd.f32 %v2374, %v2535
    %v2537 = vpop.f32.mrf.mxu0
    %v2538 = vpop.f32.mrf.mxu0
    %2539 = vdwg.mxu0
    %s2540 = scalar_lea.vmem %s9, 1
    %v2541 = vld [vmem:[%s2540] ss:$2 sm:$0xf]
    %2542 = vset.pattern.permute.xlu0 1
    %2543 = vperm.xlu0 %2542, %v2343
    %v2544 = vpop.permute.xlu0 %2543
    %v2547 = vlaneseq
    %v2548 = vshrl.u32 %v2547, 7
    %v2549 = vsub.s32 0, %v2548
    %v2550 = vrot.slane %v2541, %v2549
    %v2551 = vlaneseq
    %v2552 = vshrl.u32 %v2551, 7
    %v2553 = vsub.s32 1, %v2552
    %v2554 = vrot.slane %v2541, %v2553
    %v2555 = vlaneseq
    %v2556 = vshrl.u32 %v2555, 7
    %v2557 = vsub.s32 2, %v2556
    %v2558 = vrot.slane %v2541, %v2557
    %v2559 = vlaneseq
    %v2560 = vshrl.u32 %v2559, 7
    %v2561 = vsub.s32 3, %v2560
    %v2562 = vrot.slane %v2541, %v2561
    %v2567 = vmul.f32 %v2544, %v2550
    %v2568 = vmul.f32 %v2544, %v2554
    %v2569 = vmul.f32 %v2544, %v2558
    %v2570 = vmul.f32 %v2544, %v2562
    %v2571 = vadd.f32 %v2493, %v2567
    %v2572 = vadd.f32 %v2495, %v2568
    %v2573 = vadd.f32 %v2534, %v2569
    %v2574 = vadd.f32 %v2536, %v2570
    %v2575 = vld [vmem:[%s10] sm:$0xf]
    %v2577 = vlaneseq
    %v2578 = vshrl.u32 %v2577, 7
    %v2579 = vsub.s32 0, %v2578
    %v2580 = vrot.slane %v2575, %v2579
    %v2581 = vlaneseq
    %v2582 = vshrl.u32 %v2581, 7
    %v2583 = vsub.s32 1, %v2582
    %v2584 = vrot.slane %v2575, %v2583
    %v2585 = vlaneseq
    %v2586 = vshrl.u32 %v2585, 7
    %v2587 = vsub.s32 2, %v2586
    %v2588 = vrot.slane %v2575, %v2587
    %v2589 = vlaneseq
    %v2590 = vshrl.u32 %v2589, 7
    %v2591 = vsub.s32 3, %v2590
    %v2592 = vrot.slane %v2575, %v2591
    %v2597 = vadd.f32 %v2571, %v2580
    %v2598 = vadd.f32 %v2572, %v2584
    %v2599 = vadd.f32 %v2573, %v2588
    %v2600 = vadd.f32 %v2574, %v2592
    %v2601 = vmax.f32 %v2597, 0.0
    %v2602 = vmax.f32 %v2598, 0.0
    %v2603 = vmax.f32 %v2599, 0.0
    %v2604 = vmax.f32 %v2600, 0.0
    %v2605 = vpack.c.bf16 %v2601, %v2601
    %v2606 = vpack.c.bf16 %v2602, %v2602
    %v2607 = vpack.c.bf16 %v2603, %v2603
    %v2608 = vpack.c.bf16 %v2604, %v2604
    %v2609 = vld [vmem:[%s11] sm:$0xf]
    %v2610 = vld [vmem:[%s11 + $0x4] sm:$0xf]
    %v2611 = vld [vmem:[%s11 + $0x8] sm:$0xf]
    %v2612 = vld [vmem:[%s11 + $0xc] sm:$0xf]
    %v2613 = vld [vmem:[%s11 + $0x10] sm:$0xf]
    %v2614 = vld [vmem:[%s11 + $0x14] sm:$0xf]
    %v2615 = vld [vmem:[%s11 + $0x18] sm:$0xf]
    %v2616 = vld [vmem:[%s11 + $0x1c] sm:$0xf]
    %v2617 = vld [vmem:[%s11 + $0x20] sm:$0xf]
    %v2618 = vld [vmem:[%s11 + $0x24] sm:$0xf]
    %v2619 = vld [vmem:[%s11 + $0x28] sm:$0xf]
    %v2620 = vld [vmem:[%s11 + $0x2c] sm:$0xf]
    %v2621 = vld [vmem:[%s11 + $0x30] sm:$0xf]
    %v2622 = vld [vmem:[%s11 + $0x34] sm:$0xf]
    %v2623 = vld [vmem:[%s11 + $0x38] sm:$0xf]
    %v2624 = vld [vmem:[%s11 + $0x3c] sm:$0xf]
    %v2625 = vld [vmem:[%s11 + $0x40] sm:$0xf]
    %v2626 = vld [vmem:[%s11 + $0x44] sm:$0xf]
    %v2627 = vld [vmem:[%s11 + $0x48] sm:$0xf]
    %v2628 = vld [vmem:[%s11 + $0x4c] sm:$0xf]
    %v2629 = vld [vmem:[%s11 + $0x50] sm:$0xf]
    %v2630 = vld [vmem:[%s11 + $0x54] sm:$0xf]
    %v2631 = vld [vmem:[%s11 + $0x58] sm:$0xf]
    %v2632 = vld [vmem:[%s11 + $0x5c] sm:$0xf]
    %v2633 = vld [vmem:[%s11 + $0x60] sm:$0xf]
    %v2634 = vld [vmem:[%s11 + $0x64] sm:$0xf]
    %v2635 = vld [vmem:[%s11 + $0x68] sm:$0xf]
    %v2636 = vld [vmem:[%s11 + $0x6c] sm:$0xf]
    %v2637 = vld [vmem:[%s11 + $0x70] sm:$0xf]
    %v2638 = vld [vmem:[%s11 + $0x74] sm:$0xf]
    %v2639 = vld [vmem:[%s11 + $0x78] sm:$0xf]
    %v2640 = vld [vmem:[%s11 + $0x7c] sm:$0xf]
    %v2641 = vld [vmem:[%s11 + $0x80] sm:$0xf]
    %v2642 = vld [vmem:[%s11 + $0x84] sm:$0xf]
    %v2643 = vld [vmem:[%s11 + $0x88] sm:$0xf]
    %v2644 = vld [vmem:[%s11 + $0x8c] sm:$0xf]
    %v2645 = vld [vmem:[%s11 + $0x90] sm:$0xf]
    %v2646 = vld [vmem:[%s11 + $0x94] sm:$0xf]
    %v2647 = vld [vmem:[%s11 + $0x98] sm:$0xf]
    %v2648 = vld [vmem:[%s11 + $0x9c] sm:$0xf]
    %v2649 = vld [vmem:[%s11 + $0xa0] sm:$0xf]
    %v2650 = vld [vmem:[%s11 + $0xa4] sm:$0xf]
    %v2651 = vld [vmem:[%s11 + $0xa8] sm:$0xf]
    %v2652 = vld [vmem:[%s11 + $0xac] sm:$0xf]
    %v2653 = vld [vmem:[%s11 + $0xb0] sm:$0xf]
    %v2654 = vld [vmem:[%s11 + $0xb4] sm:$0xf]
    %v2655 = vld [vmem:[%s11 + $0xb8] sm:$0xf]
    %v2656 = vld [vmem:[%s11 + $0xbc] sm:$0xf]
    %v2657 = vld [vmem:[%s11 + $0xc0] sm:$0xf]
    %v2658 = vld [vmem:[%s11 + $0xc4] sm:$0xf]
    %v2659 = vld [vmem:[%s11 + $0xc8] sm:$0xf]
    %v2660 = vld [vmem:[%s11 + $0xcc] sm:$0xf]
    %v2661 = vld [vmem:[%s11 + $0xd0] sm:$0xf]
    %v2662 = vld [vmem:[%s11 + $0xd4] sm:$0xf]
    %v2663 = vld [vmem:[%s11 + $0xd8] sm:$0xf]
    %v2664 = vld [vmem:[%s11 + $0xdc] sm:$0xf]
    %v2665 = vld [vmem:[%s11 + $0xe0] sm:$0xf]
    %v2666 = vld [vmem:[%s11 + $0xe4] sm:$0xf]
    %v2667 = vld [vmem:[%s11 + $0xe8] sm:$0xf]
    %v2668 = vld [vmem:[%s11 + $0xec] sm:$0xf]
    %v2669 = vld [vmem:[%s11 + $0xf0] sm:$0xf]
    %v2670 = vld [vmem:[%s11 + $0xf4] sm:$0xf]
    %v2671 = vld [vmem:[%s11 + $0xf8] sm:$0xf]
    %v2672 = vld [vmem:[%s11 + $0xfc] sm:$0xf]
    %v2673 = vld [vmem:[%s12] sm:$0x1]
    %v2675 = vlaneseq
    %v2676 = vshrl.u32 %v2675, 7
    %v2677 = vsub.s32 0, %v2676
    %v2678 = vrot.slane %v2673, %v2677
    %v2744 = vunpack.c.l.b16 %v2609
    %v2745 = vunpack.c.l.b16 %v2610
    %v2746 = vunpack.c.l.b16 %v2611
    %v2747 = vunpack.c.l.b16 %v2612
    %v2748 = vunpack.c.l.b16 %v2613
    %v2749 = vunpack.c.l.b16 %v2614
    %v2750 = vunpack.c.l.b16 %v2615
    %v2751 = vunpack.c.l.b16 %v2616
    %v2752 = vunpack.c.l.b16 %v2617
    %v2753 = vunpack.c.l.b16 %v2618
    %v2754 = vunpack.c.l.b16 %v2619
    %v2755 = vunpack.c.l.b16 %v2620
    %v2756 = vunpack.c.l.b16 %v2621
    %v2757 = vunpack.c.l.b16 %v2622
    %v2758 = vunpack.c.l.b16 %v2623
    %v2759 = vunpack.c.l.b16 %v2624
    %v2760 = vunpack.c.l.b16 %v2625
    %v2761 = vunpack.c.l.b16 %v2626
    %v2762 = vunpack.c.l.b16 %v2627
    %v2763 = vunpack.c.l.b16 %v2628
    %v2764 = vunpack.c.l.b16 %v2629
    %v2765 = vunpack.c.l.b16 %v2630
    %v2766 = vunpack.c.l.b16 %v2631
    %v2767 = vunpack.c.l.b16 %v2632
    %v2768 = vunpack.c.l.b16 %v2633
    %v2769 = vunpack.c.l.b16 %v2634
    %v2770 = vunpack.c.l.b16 %v2635
    %v2771 = vunpack.c.l.b16 %v2636
    %v2772 = vunpack.c.l.b16 %v2637
    %v2773 = vunpack.c.l.b16 %v2638
    %v2774 = vunpack.c.l.b16 %v2639
    %v2775 = vunpack.c.l.b16 %v2640
    %v2776 = vunpack.c.l.b16 %v2641
    %v2777 = vunpack.c.l.b16 %v2642
    %v2778 = vunpack.c.l.b16 %v2643
    %v2779 = vunpack.c.l.b16 %v2644
    %v2780 = vunpack.c.l.b16 %v2645
    %v2781 = vunpack.c.l.b16 %v2646
    %v2782 = vunpack.c.l.b16 %v2647
    %v2783 = vunpack.c.l.b16 %v2648
    %v2784 = vunpack.c.l.b16 %v2649
    %v2785 = vunpack.c.l.b16 %v2650
    %v2786 = vunpack.c.l.b16 %v2651
    %v2787 = vunpack.c.l.b16 %v2652
    %v2788 = vunpack.c.l.b16 %v2653
    %v2789 = vunpack.c.l.b16 %v2654
    %v2790 = vunpack.c.l.b16 %v2655
    %v2791 = vunpack.c.l.b16 %v2656
    %v2792 = vunpack.c.l.b16 %v2657
    %v2793 = vunpack.c.l.b16 %v2658
    %v2794 = vunpack.c.l.b16 %v2659
    %v2795 = vunpack.c.l.b16 %v2660
    %v2796 = vunpack.c.l.b16 %v2661
    %v2797 = vunpack.c.l.b16 %v2662
    %v2798 = vunpack.c.l.b16 %v2663
    %v2799 = vunpack.c.l.b16 %v2664
    %v2800 = vunpack.c.l.b16 %v2665
    %v2801 = vunpack.c.l.b16 %v2666
    %v2802 = vunpack.c.l.b16 %v2667
    %v2803 = vunpack.c.l.b16 %v2668
    %v2804 = vunpack.c.l.b16 %v2669
    %v2805 = vunpack.c.l.b16 %v2670
    %v2806 = vunpack.c.l.b16 %v2671
    %v2807 = vunpack.c.l.b16 %v2672
    %v2808 = vpack.c.b16 %v2745, %v2744
    %v2809 = vpack.c.b16 %v2747, %v2746
    %v2810 = vpack.c.b16 %v2749, %v2748
    %v2811 = vpack.c.b16 %v2751, %v2750
    %v2812 = vpack.c.b16 %v2753, %v2752
    %v2813 = vpack.c.b16 %v2755, %v2754
    %v2814 = vpack.c.b16 %v2757, %v2756
    %v2815 = vpack.c.b16 %v2759, %v2758
    %v2816 = vpack.c.b16 %v2761, %v2760
    %v2817 = vpack.c.b16 %v2763, %v2762
    %v2818 = vpack.c.b16 %v2765, %v2764
    %v2819 = vpack.c.b16 %v2767, %v2766
    %v2820 = vpack.c.b16 %v2769, %v2768
    %v2821 = vpack.c.b16 %v2771, %v2770
    %v2822 = vpack.c.b16 %v2773, %v2772
    %v2823 = vpack.c.b16 %v2775, %v2774
    %v2824 = vpack.c.b16 %v2777, %v2776
    %v2825 = vpack.c.b16 %v2779, %v2778
    %v2826 = vpack.c.b16 %v2781, %v2780
    %v2827 = vpack.c.b16 %v2783, %v2782
    %v2828 = vpack.c.b16 %v2785, %v2784
    %v2829 = vpack.c.b16 %v2787, %v2786
    %v2830 = vpack.c.b16 %v2789, %v2788
    %v2831 = vpack.c.b16 %v2791, %v2790
    %v2832 = vpack.c.b16 %v2793, %v2792
    %v2833 = vpack.c.b16 %v2795, %v2794
    %v2834 = vpack.c.b16 %v2797, %v2796
    %v2835 = vpack.c.b16 %v2799, %v2798
    %v2836 = vpack.c.b16 %v2801, %v2800
    %v2837 = vpack.c.b16 %v2803, %v2802
    %v2838 = vpack.c.b16 %v2805, %v2804
    %v2839 = vpack.c.b16 %v2807, %v2806
    %2872 = vmatprep.subr.bf16.mxu0 0
    %2873 = vmatpush1.bf16.msra.mxu0 %v2815
    %2874 = vmatprep.subr.bf16.mxu0 0
    %2875 = vmatpush1.bf16.msra.mxu0 %v2814
    %2876 = vmatprep.subr.bf16.mxu0 0
    %2877 = vmatpush1.bf16.msra.mxu0 %v2813
    %2878 = vmatprep.subr.bf16.mxu0 0
    %2879 = vmatpush1.bf16.msra.mxu0 %v2812
    %2880 = vmatprep.subr.bf16.mxu0 0
    %2881 = vmatpush1.bf16.msra.mxu0 %v2811
    %2882 = vmatprep.subr.bf16.mxu0 0
    %2883 = vmatpush1.bf16.msra.mxu0 %v2810
    %2884 = vmatprep.subr.bf16.mxu0 0
    %2885 = vmatpush1.bf16.msra.mxu0 %v2809
    %2886 = vmatprep.subr.bf16.mxu0 0
    %2887 = vmatpush1.bf16.msra.mxu0 %v2808
    %2888 = vmatprep.subr.bf16.mxu0 0
    %2889 = vmatpush2.bf16.msra.mxu0 %v2823
    %2890 = vmatprep.subr.bf16.mxu0 0
    %2891 = vmatpush2.bf16.msra.mxu0 %v2822
    %2892 = vmatprep.subr.bf16.mxu0 0
    %2893 = vmatpush2.bf16.msra.mxu0 %v2821
    %2894 = vmatprep.subr.bf16.mxu0 0
    %2895 = vmatpush2.bf16.msra.mxu0 %v2820
    %2896 = vmatprep.subr.bf16.mxu0 0
    %2897 = vmatpush2.bf16.msra.mxu0 %v2819
    %2898 = vmatprep.subr.bf16.mxu0 0
    %2899 = vmatpush2.bf16.msra.mxu0 %v2818
    %2900 = vmatprep.subr.bf16.mxu0 0
    %2901 = vmatpush2.bf16.msra.mxu0 %v2817
    %2902 = vmatprep.subr.bf16.mxu0 0
    %2903 = vmatpush2.bf16.msra.mxu0 %v2816
    %2904 = vmatprep.mubr.bf16.mxu0 %v2606
    %2905 = vmatmul.mubr.bf16.gmra.mxu0 %v2605
    %v2906 = vpop.f32.mrf.mxu0
    %v2907 = vadd.f32 %v2678, %v2906
    %v2908 = vpop.f32.mrf.mxu0
    %v2909 = vpop.f32.mrf.mxu0
    %v2910 = vpop.f32.mrf.mxu0
    %2911 = vdwg.mxu0
    %2912 = vmatprep.subr.bf16.mxu0 0
    %2913 = vmatpush1.bf16.msra.mxu0 %v2831
    %2914 = vmatprep.subr.bf16.mxu0 0
    %2915 = vmatpush1.bf16.msra.mxu0 %v2830
    %2916 = vmatprep.subr.bf16.mxu0 0
    %2917 = vmatpush1.bf16.msra.mxu0 %v2829
    %2918 = vmatprep.subr.bf16.mxu0 0
    %2919 = vmatpush1.bf16.msra.mxu0 %v2828
    %2920 = vmatprep.subr.bf16.mxu0 0
    %2921 = vmatpush1.bf16.msra.mxu0 %v2827
    %2922 = vmatprep.subr.bf16.mxu0 0
    %2923 = vmatpush1.bf16.msra.mxu0 %v2826
    %2924 = vmatprep.subr.bf16.mxu0 0
    %2925 = vmatpush1.bf16.msra.mxu0 %v2825
    %2926 = vmatprep.subr.bf16.mxu0 0
    %2927 = vmatpush1.bf16.msra.mxu0 %v2824
    %2928 = vmatprep.subr.bf16.mxu0 0
    %2929 = vmatpush2.bf16.msra.mxu0 %v2839
    %2930 = vmatprep.subr.bf16.mxu0 0
    %2931 = vmatpush2.bf16.msra.mxu0 %v2838
    %2932 = vmatprep.subr.bf16.mxu0 0
    %2933 = vmatpush2.bf16.msra.mxu0 %v2837
    %2934 = vmatprep.subr.bf16.mxu0 0
    %2935 = vmatpush2.bf16.msra.mxu0 %v2836
    %2936 = vmatprep.subr.bf16.mxu0 0
    %2937 = vmatpush2.bf16.msra.mxu0 %v2835
    %2938 = vmatprep.subr.bf16.mxu0 0
    %2939 = vmatpush2.bf16.msra.mxu0 %v2834
    %2940 = vmatprep.subr.bf16.mxu0 0
    %2941 = vmatpush2.bf16.msra.mxu0 %v2833
    %2942 = vmatprep.subr.bf16.mxu0 0
    %2943 = vmatpush2.bf16.msra.mxu0 %v2832
    %2944 = vmatprep.mubr.bf16.mxu0 %v2608
    %2945 = vmatmul.mubr.bf16.gmra.mxu0 %v2607
    %v2946 = vpop.f32.mrf.mxu0
    %v2947 = vadd.f32 %v2907, %v2946
    %v2948 = vpop.f32.mrf.mxu0
    %v2949 = vpop.f32.mrf.mxu0
    %v2950 = vpop.f32.mrf.mxu0
    %2951 = vdwg.mxu0
    %2952 = vst [vmem:[#allocation2] sm:$0x3] %v2947
    // Predicated region
    $region54: #{fsa_dqn_forward.1} parent=1 // pred_check
      _
    $region55: #{fsa_dqn_forward.1} parent=1 // pred_check_branch
      %2954 = sbr.rel (0) target = $region57
    $region56: #{fsa_dqn_forward.1} parent=1 // pred_region
      %s2956 = ssub.s32 32, 32
      %2957 = vsyncadd [#allocation3], %s2956
      %s2959 = sshll.u32 [#allocation2], 4
      %s2960 = int_to_ptr.vmem [resolvable:$true] %s2959
      %2962 = dma.vmem_to_hbm [thread:$0]  %s2960, 32, %s13, [#allocation3]
    $region57: #{fsa_dqn_forward.1} parent=1 // pred_fallthru
      _
    // Predicated region
    $region58: #{fsa_dqn_forward.1} parent=1 // pred_check
      _
    $region59: #{fsa_dqn_forward.1} parent=1 // pred_check_branch
      %2964 = sbr.rel (0) target = $region61
    $region60: #{fsa_dqn_forward.1} parent=1 // pred_region
      %2965 = dma.done [#allocation3], 32
    $region61: #{fsa_dqn_forward.1} parent=1 // pred_fallthru
      _
    %2966 = vsyncpa [#allocation3], 1

</llo_original>
